<compile_context>
chip_gen: v6e
topology: v6e:2x2x1
jax: 0.10.0
libtpu: 0.0.40
codegen_flags: <defaults>
</compile_context>

<pallas_src>
import jax
import jax.numpy as jnp
from jax.experimental import pallas as pl
from jax.experimental.pallas import tpu as pltpu


def _make_vae_kernel(latent, mm_dtype, spatial_tile, s_valid, mask_padding):
    """Fused encoder kernel: conv1+ReLU -> conv2+ReLU -> (mu|log_sigma) head ->
    sigma=exp -> z = mu + sigma*eps, plus a per-tile KL partial sum.

    The x tile is cast to mm_dtype *inside* the kernel (no wrapper-side HBM
    cast round trip); all accumulation / exp / KL math stays f32.
    """
    def kernel(x_ref, w1_ref, b1_ref, w2_ref, b2_ref, whead_ref, bhead_ref,
               noise_ref, z_ref, klpart_ref):
        x = x_ref[0].astype(mm_dtype)                        # (C_in, ts)

        # Conv2d(in_dim -> nf, 1x1) + ReLU   (channel mix == MXU matmul)
        h1 = jnp.dot(w1_ref[...], x,
                     preferred_element_type=jnp.float32) + b1_ref[...]
        h1 = jnp.maximum(h1, 0.0).astype(mm_dtype)           # (nf, ts)

        # Conv2d(nf -> nf, 1x1) + ReLU
        h2 = jnp.dot(w2_ref[...], h1,
                     preferred_element_type=jnp.float32) + b2_ref[...]
        h2 = jnp.maximum(h2, 0.0).astype(mm_dtype)           # (nf, ts)

        # fused heads: one matmul producing [mu ; log_sigma] stacked on sublanes
        head = jnp.dot(whead_ref[...], h2,
                       preferred_element_type=jnp.float32) + bhead_ref[...]
        mu = head[:latent, :]                                # (latent, ts)
        log_sigma = head[latent:, :]                         # (latent, ts)
        sigma = jnp.exp(log_sigma)                           # EUP, f32

        # reparameterization: z = mu + sigma * eps  (lane-dense unmasked store)
        z_ref[0] = (mu + sigma * noise_ref[0]).astype(z_ref.dtype)

        # per-tile KL partial: sum(sigma^2 + mu^2 - log(sigma) - 1/2)
        kl_terms = sigma * sigma + mu * mu - log_sigma - 0.5
        if mask_padding:
            col = (jax.lax.broadcasted_iota(jnp.int32, kl_terms.shape, 1)
                   + pl.program_id(1) * spatial_tile)
            kl_terms = jnp.where(col < s_valid, kl_terms, 0.0)
        kl_lane = jnp.sum(kl_terms, axis=-1, keepdims=True)  # lane reduce (XLU)
        kl_sc = jnp.sum(kl_lane, axis=0, keepdims=True)      # (1, 1)
        klpart_ref[...] = kl_sc.reshape(1, 1, 1, 1)
    return kernel


def _pick_spatial_tile(s_pad, c_in, nf, latent, *, max_ts, vmem_budget_bytes):
    """Largest lane-dense (multiple-of-128) spatial tile that divides s_pad and
    whose estimated per-step VMEM footprint (double-buffered f32 x/noise/z tiles
    + compiler scratch for the intermediates) fits the budget."""
    per_col = (4 * 2 * (c_in + 2 * latent)   # x + noise + z tiles, f32, 2x buffered
               + 2 * c_in                    # in-kernel bf16 copy of x
               + (4 + 2) * 2 * nf            # h1/h2: f32 dot result + bf16 copy
               + 4 * 6 * latent)             # head / mu / sigma / z f32 temps
    ts = min(s_pad, max_ts)
    ts -= ts % 128
    ts = max(ts, 128)
    while ts > 128 and (s_pad % ts != 0 or ts * per_col > vmem_budget_bytes):
        ts -= 128
    return ts


def prepare_encoder_params(params, *, use_bf16_matmul=True):
    """Once-per-model weight prep (hoisted out of the per-call wrapper):
    fuse the mu/log_sigma heads into a single matmul and cast matmul operands
    (bf16 by default: ~2x MXU rate on v5e/v6e/v7x, half the weight DMA bytes).
    Biases stay f32; all accumulation stays f32 in the kernel."""
    mm_dtype = jnp.bfloat16 if use_bf16_matmul else jnp.float32
    return {
        "w1": params["w1"].astype(mm_dtype),
        "b1": params["b1"].astype(jnp.float32),
        "w2": params["w2"].astype(mm_dtype),
        "b2": params["b2"].astype(jnp.float32),
        "whead": jnp.concatenate([params["wmu"], params["wstd"]],
                                 axis=0).astype(mm_dtype),
        "bhead": jnp.concatenate([params["bmu"], params["bstd"]],
                                 axis=0).astype(jnp.float32),
    }


def variational_encoder_forward(x_nchw, enc, noise_nchw, *,
                                max_spatial_tile=4096,
                                vmem_budget_bytes=26 << 20,
                                vmem_limit_bytes=48 << 20,
                                single_buffer_weights=True):
    """x_nchw: (N, in_dim, H, W), noise_nchw: (N, latent, H, W).
    enc: output of prepare_encoder_params.
    Returns (z_nchw, kl_scalar) matching VariationalEncoder.forward / .kl."""
    N, c_in, H, W = x_nchw.shape
    nf = enc["w1"].shape[0]
    latent = enc["whead"].shape[0] // 2   # keep latent a multiple of 8 for aligned slices
    mm_dtype = enc["w1"].dtype
    S = H * W

    # NCHW already gives (channels, spatial) contiguous per image: plain
    # reshapes, no transposes / extra HBM round trips.  Pad spatial up to a
    # multiple of 128 so the z store stays an unmasked lane-dense vst; padded
    # KL columns are masked inside the kernel.
    s_pad = ((S + 127) // 128) * 128
    needs_pad = s_pad != S
    x3 = x_nchw.reshape(N, c_in, S)
    noise3 = noise_nchw.reshape(N, latent, S).astype(jnp.float32)
    if needs_pad:
        pad = ((0, 0), (0, 0), (0, s_pad - S))
        x3 = jnp.pad(x3, pad)
        noise3 = jnp.pad(noise3, pad)

    ts = _pick_spatial_tile(s_pad, c_in, nf, latent,
                            max_ts=max_spatial_tile,
                            vmem_budget_bytes=vmem_budget_bytes)
    # Guarantee at least two grid steps so a 2-TC megacore (v7x) has work to shard.
    if N * (s_pad // ts) < 2 and ts % 256 == 0:
        ts //= 2
    num_tiles = s_pad // ts
    grid = (N, num_tiles)

    # Grid-invariant weights/biases: full-extent blocks, single-buffered when
    # supported (double-buffering never-changing blocks only burns VMEM).
    weight_mode = pl.Buffered(1) if single_buffer_weights else None

    def full(a):
        if weight_mode is None:
            return pl.BlockSpec(a.shape, lambda n, s: (0,) * a.ndim)
        return pl.BlockSpec(a.shape, lambda n, s: (0,) * a.ndim,
                            pipeline_mode=weight_mode)

    kernel = _make_vae_kernel(latent, mm_dtype, ts, S, needs_pad)

    z3, klparts = pl.pallas_call(
        kernel,
        out_shape=(
            jax.ShapeDtypeStruct((N, latent, s_pad), jnp.float32),
            jax.ShapeDtypeStruct((N, num_tiles, 1, 1), jnp.float32),
        ),
        grid_spec=pltpu.PrefetchScalarGridSpec(
            num_scalar_prefetch=0,
            grid=grid,
            in_specs=[
                pl.BlockSpec((1, c_in, ts), lambda n, s: (n, 0, s)),   # x (f32; cast in-kernel)
                full(enc["w1"]), full(enc["b1"]),
                full(enc["w2"]), full(enc["b2"]),
                full(enc["whead"]), full(enc["bhead"]),
                pl.BlockSpec((1, latent, ts), lambda n, s: (n, 0, s)),  # noise
            ],
            out_specs=[
                pl.BlockSpec((1, latent, ts), lambda n, s: (n, 0, s)),  # z (lane-dense)
                pl.BlockSpec((1, 1, 1, 1), lambda n, s: (n, s, 0, 0)),  # KL partial
            ],
        ),
        compiler_params=pltpu.CompilerParams(
            # per-tile KL partials => no carried dep => both axes independent
            # (shards across v7x's 2 TensorCores).
            dimension_semantics=("parallel", "parallel"),
            vmem_limit_bytes=vmem_limit_bytes),
    )(x3, enc["w1"], enc["b1"], enc["w2"], enc["b2"],
      enc["whead"], enc["bhead"], noise3)

    kl = jnp.sum(klparts) / jnp.float32(N * latent * S)
    if needs_pad:
        z3 = z3[:, :, :S]
    z_nchw = z3.reshape(N, latent, H, W)
    return z_nchw, kl


def init_params(key, in_dim, nf, latent):
    """Deterministic synthetic weights in PyTorch Conv2d-1x1 orientation:
    weights (out_ch, in_ch), biases (out_ch, 1)."""
    ks = jax.random.split(key, 8)
    s = lambda fan_in: 1.0 / jnp.sqrt(jnp.float32(fan_in))
    return {
        "w1":   jax.random.normal(ks[0], (nf, in_dim), jnp.float32) * s(in_dim),
        "b1":   jax.random.normal(ks[1], (nf, 1), jnp.float32) * 0.01,
        "w2":   jax.random.normal(ks[2], (nf, nf), jnp.float32) * s(nf),
        "b2":   jax.random.normal(ks[3], (nf, 1), jnp.float32) * 0.01,
        "wmu":  jax.random.normal(ks[4], (latent, nf), jnp.float32) * s(nf),
        "bmu":  jax.random.normal(ks[5], (latent, 1), jnp.float32) * 0.01,
        "wstd": jax.random.normal(ks[6], (latent, nf), jnp.float32) * s(nf),
        "bstd": jax.random.normal(ks[7], (latent, 1), jnp.float32) * 0.01,
    }


def reference_forward(x_nchw, params, noise_nchw):
    """Pure-JAX reference mirroring the PyTorch forward (1x1 convs)."""
    N, C, H, W = x_nchw.shape
    x = x_nchw.reshape(N, C, H * W)

    def conv1x1(w, b, t):                 # w: (out, in), b: (out, 1)
        return jnp.einsum("oc,ncs->nos", w, t) + b[None]

    h1 = jnp.maximum(conv1x1(params["w1"], params["b1"], x), 0.0)
    h2 = jnp.maximum(conv1x1(params["w2"], params["b2"], h1), 0.0)
    mu = conv1x1(params["wmu"], params["bmu"], h2)
    log_sigma = conv1x1(params["wstd"], params["bstd"], h2)
    sigma = jnp.exp(log_sigma)
    latent = mu.shape[1]
    noise = noise_nchw.reshape(N, latent, H * W)
    z = mu + sigma * noise
    kl = jnp.mean(sigma ** 2 + mu ** 2 - log_sigma - 0.5)
    return z.reshape(N, latent, H, W), kl


if __name__ == "__main__":
    # Small shapes consistent with the module (scaled-down in_dim/nf/latent).
    N, in_dim, H, W = 2, 64, 16, 16
    nf, latent = 32, 16

    key = jax.random.PRNGKey(0)
    k_x, k_noise, k_params = jax.random.split(key, 3)

    x = jax.random.normal(k_x, (N, in_dim, H, W), jnp.float32)
    # torch.randn(mu.shape) equivalent, drawn deterministically outside the kernel.
    noise = jax.random.normal(k_noise, (N, latent, H, W), jnp.float32)
    params = init_params(k_params, in_dim, nf, latent)

    z_ref, kl_ref = reference_forward(x, params, noise)

    def run(enc, single_buffer):
        z, kl = variational_encoder_forward(
            x, enc, noise, single_buffer_weights=single_buffer)
        return jax.block_until_ready(z), jax.block_until_ready(kl)

    # Exact-precision path (f32 matmul operands) — tight check of kernel logic.
    enc_f32 = prepare_encoder_params(params, use_bf16_matmul=False)
    single_buffer_ok = True
    try:
        z32, kl32 = run(enc_f32, True)
        ok = bool(jnp.allclose(z32, z_ref, atol=1e-4, rtol=1e-4)
                  and jnp.allclose(kl32, kl_ref, atol=1e-4, rtol=1e-4))
    except Exception:
        ok = False
    if not ok:
        # jax version without BlockSpec pipeline_mode / Buffered(1) support:
        # fall back to default double-buffered weights (perf-only difference).
        single_buffer_ok = False
        z32, kl32 = run(enc_f32, False)
    assert jnp.allclose(z32, z_ref, atol=1e-4, rtol=1e-4), "z mismatch (f32 path)"
    assert jnp.allclose(kl32, kl_ref, atol=1e-4, rtol=1e-4), "kl mismatch (f32 path)"

    # Default fast path: bf16 matmul operands, f32 accumulation.  Loose norm
    # check — the difference is expected bf16 operand precision loss only
    # (kernel logic is verified exactly by the f32 path above).
    enc_bf16 = prepare_encoder_params(params)          # use_bf16_matmul=True
    zb, klb = run(enc_bf16, single_buffer_ok)
    z_rel = float(jnp.linalg.norm(zb - z_ref) / jnp.linalg.norm(z_ref))
    kl_rel = float(jnp.abs(klb - kl_ref) / jnp.abs(kl_ref))
    assert z_rel < 1e-1, f"z mismatch (bf16 path): rel={z_rel}"
    assert kl_rel < 5e-2, f"kl mismatch (bf16 path): rel={kl_rel}"

    print("KERNEL_OK")
</pallas_src>

<mosaic_0001>
module attributes {stable_mosaic.version = 11 : i64} {
  func.func @kernel(%arg0: i32, %arg1: i32, %arg2: memref<1x64x256xf32, #tpu.memory_space<vmem>>, %arg3: memref<32x64xf32, #tpu.memory_space<vmem>>, %arg4: memref<32x1xf32, #tpu.memory_space<vmem>>, %arg5: memref<32x32xf32, #tpu.memory_space<vmem>>, %arg6: memref<32x1xf32, #tpu.memory_space<vmem>>, %arg7: memref<32x32xf32, #tpu.memory_space<vmem>>, %arg8: memref<32x1xf32, #tpu.memory_space<vmem>>, %arg9: memref<1x16x256xf32, #tpu.memory_space<vmem>>, %arg10: memref<1x16x256xf32, #tpu.memory_space<vmem>>, %arg11: memref<1x1x1x1xf32, #tpu.memory_space<vmem>>) attributes {dimension_semantics = [#tpu.dimension_semantics<parallel>, #tpu.dimension_semantics<parallel>], iteration_bounds = array<i64: 2, 1>, scalar_prefetch = 0 : i64, scratch_operands = 0 : i64, tpu.core_type = #tpu.core_type<tc>, window_params = [{transform_indices = @transform_0, window_bounds = array<i64: 1, 64, 256>}, {pipeline_mode = #tpu.pipeline_mode<synchronous>, transform_indices = @transform_1, window_bounds = array<i64: 32, 64>}, {pipeline_mode = #tpu.pipeline_mode<synchronous>, transform_indices = @transform_2, window_bounds = array<i64: 32, 1>}, {pipeline_mode = #tpu.pipeline_mode<synchronous>, transform_indices = @transform_3, window_bounds = array<i64: 32, 32>}, {pipeline_mode = #tpu.pipeline_mode<synchronous>, transform_indices = @transform_4, window_bounds = array<i64: 32, 1>}, {pipeline_mode = #tpu.pipeline_mode<synchronous>, transform_indices = @transform_5, window_bounds = array<i64: 32, 32>}, {pipeline_mode = #tpu.pipeline_mode<synchronous>, transform_indices = @transform_6, window_bounds = array<i64: 32, 1>}, {transform_indices = @transform_7, window_bounds = array<i64: 1, 16, 256>}, {transform_indices = @transform_8, window_bounds = array<i64: 1, 16, 256>}, {transform_indices = @transform_9, window_bounds = array<i64: 1, 1, 1, 1>}]} {
    %c0 = arith.constant 0 : index
    %c0_0 = arith.constant 0 : index
    %c0_1 = arith.constant 0 : index
    %0 = vector.load %arg2[%c0, %c0_0, %c0_1] : memref<1x64x256xf32, #tpu.memory_space<vmem>>, vector<1x64x256xf32>
    %1 = vector.shape_cast %0 : vector<1x64x256xf32> to vector<64x256xf32>
    %c0_2 = arith.constant 0 : index
    %c0_3 = arith.constant 0 : index
    %2 = vector.load %arg3[%c0_2, %c0_3] : memref<32x64xf32, #tpu.memory_space<vmem>>, vector<32x64xf32>
    %cst = arith.constant dense<0.000000e+00> : vector<32x256xf32>
    %3 = tpu.matmul %2, %1, %cst {dimension_numbers = #tpu.dot_dimension_numbers<[1], [0], [0], [1], [0, 0, 1, 1], [], []>} : vector<32x64xf32>, vector<64x256xf32>, vector<32x256xf32> -> vector<32x256xf32>
    %c0_4 = arith.constant 0 : index
    %c0_5 = arith.constant 0 : index
    %4 = vector.load %arg4[%c0_4, %c0_5] : memref<32x1xf32, #tpu.memory_space<vmem>>, vector<32x1xf32>
    %5 = vector.broadcast %4 : vector<32x1xf32> to vector<32x256xf32>
    %6 = arith.addf %3, %5 : vector<32x256xf32>
    %cst_6 = arith.constant 0.000000e+00 : f32
    %7 = vector.broadcast %cst_6 : f32 to vector<32x256xf32>
    %8 = arith.maximumf %6, %7 : vector<32x256xf32>
    %c0_7 = arith.constant 0 : index
    %c0_8 = arith.constant 0 : index
    %9 = vector.load %arg5[%c0_7, %c0_8] : memref<32x32xf32, #tpu.memory_space<vmem>>, vector<32x32xf32>
    %cst_9 = arith.constant dense<0.000000e+00> : vector<32x256xf32>
    %10 = tpu.matmul %9, %8, %cst_9 {dimension_numbers = #tpu.dot_dimension_numbers<[1], [0], [0], [1], [0, 0, 1, 1], [], []>} : vector<32x32xf32>, vector<32x256xf32>, vector<32x256xf32> -> vector<32x256xf32>
    %c0_10 = arith.constant 0 : index
    %c0_11 = arith.constant 0 : index
    %11 = vector.load %arg6[%c0_10, %c0_11] : memref<32x1xf32, #tpu.memory_space<vmem>>, vector<32x1xf32>
    %12 = vector.broadcast %11 : vector<32x1xf32> to vector<32x256xf32>
    %13 = arith.addf %10, %12 : vector<32x256xf32>
    %cst_12 = arith.constant 0.000000e+00 : f32
    %14 = vector.broadcast %cst_12 : f32 to vector<32x256xf32>
    %15 = arith.maximumf %13, %14 : vector<32x256xf32>
    %c0_13 = arith.constant 0 : index
    %c0_14 = arith.constant 0 : index
    %16 = vector.load %arg7[%c0_13, %c0_14] : memref<32x32xf32, #tpu.memory_space<vmem>>, vector<32x32xf32>
    %cst_15 = arith.constant dense<0.000000e+00> : vector<32x256xf32>
    %17 = tpu.matmul %16, %15, %cst_15 {dimension_numbers = #tpu.dot_dimension_numbers<[1], [0], [0], [1], [0, 0, 1, 1], [], []>} : vector<32x32xf32>, vector<32x256xf32>, vector<32x256xf32> -> vector<32x256xf32>
    %c0_16 = arith.constant 0 : index
    %c0_17 = arith.constant 0 : index
    %18 = vector.load %arg8[%c0_16, %c0_17] : memref<32x1xf32, #tpu.memory_space<vmem>>, vector<32x1xf32>
    %19 = vector.broadcast %18 : vector<32x1xf32> to vector<32x256xf32>
    %20 = arith.addf %17, %19 : vector<32x256xf32>
    %21 = vector.extract_strided_slice %20 {offsets = [0, 0], sizes = [16, 256], strides = [1, 1]} : vector<32x256xf32> to vector<16x256xf32>
    %22 = vector.extract_strided_slice %20 {offsets = [16, 0], sizes = [16, 256], strides = [1, 1]} : vector<32x256xf32> to vector<16x256xf32>
    %23 = math.exp %22 : vector<16x256xf32>
    %c0_18 = arith.constant 0 : index
    %c0_19 = arith.constant 0 : index
    %c0_20 = arith.constant 0 : index
    %24 = vector.load %arg9[%c0_18, %c0_19, %c0_20] : memref<1x16x256xf32, #tpu.memory_space<vmem>>, vector<1x16x256xf32>
    %25 = vector.shape_cast %24 : vector<1x16x256xf32> to vector<16x256xf32>
    %26 = arith.mulf %23, %25 : vector<16x256xf32>
    %27 = arith.addf %21, %26 : vector<16x256xf32>
    %c0_21 = arith.constant 0 : index
    %c0_22 = arith.constant 0 : index
    %c0_23 = arith.constant 0 : index
    %28 = vector.load %arg10[%c0_21, %c0_22, %c0_23] : memref<1x16x256xf32, #tpu.memory_space<vmem>>, vector<1x16x256xf32>
    %29 = vector.shape_cast %28 : vector<1x16x256xf32> to vector<16x256xf32>
    %30 = vector.shape_cast %27 : vector<16x256xf32> to vector<1x16x256xf32>
    tpu.vector_store %arg10[%c0_21, %c0_22, %c0_23], %30 {strides = array<i32>} : memref<1x16x256xf32, #tpu.memory_space<vmem>>, vector<1x16x256xf32>,
    %31 = arith.mulf %23, %23 : vector<16x256xf32>
    %32 = arith.mulf %21, %21 : vector<16x256xf32>
    %33 = arith.addf %31, %32 : vector<16x256xf32>
    %34 = arith.subf %33, %22 : vector<16x256xf32>
    %cst_24 = arith.constant 5.000000e-01 : f32
    %35 = vector.broadcast %cst_24 : f32 to vector<16x256xf32>
    %36 = arith.subf %34, %35 : vector<16x256xf32>
    %cst_25 = arith.constant dense<0.000000e+00> : vector<16xf32>
    %37 = vector.multi_reduction <add>, %36, %cst_25 [1] : vector<16x256xf32> to vector<16xf32>
    %38 = vector.shape_cast %37 : vector<16xf32> to vector<16x1xf32>
    %cst_26 = arith.constant dense<0.000000e+00> : vector<1xf32>
    %39 = vector.multi_reduction <add>, %38, %cst_26 [0] : vector<16x1xf32> to vector<1xf32>
    %40 = vector.shape_cast %39 : vector<1xf32> to vector<1x1xf32>
    %41 = vector.shape_cast %40 : vector<1x1xf32> to vector<1x1x1x1xf32>
    %c0_27 = arith.constant 0 : index
    %c0_28 = arith.constant 0 : index
    %c0_29 = arith.constant 0 : index
    %c0_30 = arith.constant 0 : index
    %42 = vector.load %arg11[%c0_27, %c0_28, %c0_29, %c0_30] : memref<1x1x1x1xf32, #tpu.memory_space<vmem>>, vector<1x1x1x1xf32>
    tpu.vector_store %arg11[%c0_27, %c0_28, %c0_29, %c0_30], %41 {strides = array<i32>} : memref<1x1x1x1xf32, #tpu.memory_space<vmem>>, vector<1x1x1x1xf32>,
    return
  }
  func.func @transform_0(%arg0: i32, %arg1: i32) -> (i32, i32, i32) {
    %c0_i32 = arith.constant 0 : i32
    %c0_i32_0 = arith.constant 0 : i32
    return %arg0, %c0_i32, %arg1 : i32, i32, i32
  }
  func.func @transform_1(%arg0: i32, %arg1: i32) -> (i32, i32) {
    %c0_i32 = arith.constant 0 : i32
    %c0_i32_0 = arith.constant 0 : i32
    %c0_i32_1 = arith.constant 0 : i32
    return %c0_i32, %c0_i32_0 : i32, i32
  }
  func.func @transform_2(%arg0: i32, %arg1: i32) -> (i32, i32) {
    %c0_i32 = arith.constant 0 : i32
    %c0_i32_0 = arith.constant 0 : i32
    %c0_i32_1 = arith.constant 0 : i32
    return %c0_i32, %c0_i32_0 : i32, i32
  }
  func.func @transform_3(%arg0: i32, %arg1: i32) -> (i32, i32) {
    %c0_i32 = arith.constant 0 : i32
    %c0_i32_0 = arith.constant 0 : i32
    %c0_i32_1 = arith.constant 0 : i32
    return %c0_i32, %c0_i32_0 : i32, i32
  }
  func.func @transform_4(%arg0: i32, %arg1: i32) -> (i32, i32) {
    %c0_i32 = arith.constant 0 : i32
    %c0_i32_0 = arith.constant 0 : i32
    %c0_i32_1 = arith.constant 0 : i32
    return %c0_i32, %c0_i32_0 : i32, i32
  }
  func.func @transform_5(%arg0: i32, %arg1: i32) -> (i32, i32) {
    %c0_i32 = arith.constant 0 : i32
    %c0_i32_0 = arith.constant 0 : i32
    %c0_i32_1 = arith.constant 0 : i32
    return %c0_i32, %c0_i32_0 : i32, i32
  }
  func.func @transform_6(%arg0: i32, %arg1: i32) -> (i32, i32) {
    %c0_i32 = arith.constant 0 : i32
    %c0_i32_0 = arith.constant 0 : i32
    %c0_i32_1 = arith.constant 0 : i32
    return %c0_i32, %c0_i32_0 : i32, i32
  }
  func.func @transform_7(%arg0: i32, %arg1: i32) -> (i32, i32, i32) {
    %c0_i32 = arith.constant 0 : i32
    %c0_i32_0 = arith.constant 0 : i32
    return %arg0, %c0_i32, %arg1 : i32, i32, i32
  }
  func.func @transform_8(%arg0: i32, %arg1: i32) -> (i32, i32, i32) {
    %c0_i32 = arith.constant 0 : i32
    %c0_i32_0 = arith.constant 0 : i32
    return %arg0, %c0_i32, %arg1 : i32, i32, i32
  }
  func.func @transform_9(%arg0: i32, %arg1: i32) -> (i32, i32, i32, i32) {
    %c0_i32 = arith.constant 0 : i32
    %c0_i32_0 = arith.constant 0 : i32
    %c0_i32_1 = arith.constant 0 : i32
    return %arg0, %arg1, %c0_i32, %c0_i32_0 : i32, i32, i32, i32
  }
}

module attributes {stable_mosaic.version = 11 : i64} {
  func.func @kernel(%arg0: i32, %arg1: i32, %arg2: memref<1x64x256xf32, #tpu.memory_space<vmem>>, %arg3: memref<32x64xf32, #tpu.memory_space<vmem>>, %arg4: memref<32x1xf32, #tpu.memory_space<vmem>>, %arg5: memref<32x32xf32, #tpu.memory_space<vmem>>, %arg6: memref<32x1xf32, #tpu.memory_space<vmem>>, %arg7: memref<32x32xf32, #tpu.memory_space<vmem>>, %arg8: memref<32x1xf32, #tpu.memory_space<vmem>>, %arg9: memref<1x16x256xf32, #tpu.memory_space<vmem>>, %arg10: memref<1x16x256xf32, #tpu.memory_space<vmem>>, %arg11: memref<1x1x1x1xf32, #tpu.memory_space<vmem>>) attributes {dimension_semantics = [#tpu.dimension_semantics<parallel>, #tpu.dimension_semantics<parallel>], iteration_bounds = array<i64: 2, 1>, scalar_prefetch = 0 : i64, scratch_operands = 0 : i64, tpu.core_type = #tpu.core_type<tc>, window_params = [{transform_indices = @transform_0, window_bounds = array<i64: 1, 64, 256>}, {pipeline_mode = #tpu.pipeline_mode<synchronous>, transform_indices = @transform_1, window_bounds = array<i64: 32, 64>}, {pipeline_mode = #tpu.pipeline_mode<synchronous>, transform_indices = @transform_2, window_bounds = array<i64: 32, 1>}, {pipeline_mode = #tpu.pipeline_mode<synchronous>, transform_indices = @transform_3, window_bounds = array<i64: 32, 32>}, {pipeline_mode = #tpu.pipeline_mode<synchronous>, transform_indices = @transform_4, window_bounds = array<i64: 32, 1>}, {pipeline_mode = #tpu.pipeline_mode<synchronous>, transform_indices = @transform_5, window_bounds = array<i64: 32, 32>}, {pipeline_mode = #tpu.pipeline_mode<synchronous>, transform_indices = @transform_6, window_bounds = array<i64: 32, 1>}, {transform_indices = @transform_7, window_bounds = array<i64: 1, 16, 256>}, {transform_indices = @transform_8, window_bounds = array<i64: 1, 16, 256>}, {transform_indices = @transform_9, window_bounds = array<i64: 1, 1, 1, 1>}]} {
    %c0 = arith.constant 0 : index
    %c0_0 = arith.constant 0 : index
    %c0_1 = arith.constant 0 : index
    %0 = vector.load %arg2[%c0, %c0_0, %c0_1] : memref<1x64x256xf32, #tpu.memory_space<vmem>>, vector<1x64x256xf32>
    %1 = vector.shape_cast %0 : vector<1x64x256xf32> to vector<64x256xf32>
    %c0_2 = arith.constant 0 : index
    %c0_3 = arith.constant 0 : index
    %2 = vector.load %arg3[%c0_2, %c0_3] : memref<32x64xf32, #tpu.memory_space<vmem>>, vector<32x64xf32>
    %cst = arith.constant dense<0.000000e+00> : vector<32x256xf32>
    %3 = tpu.matmul %2, %1, %cst {dimension_numbers = #tpu.dot_dimension_numbers<[1], [0], [0], [1], [0, 0, 1, 1], [], []>} : vector<32x64xf32>, vector<64x256xf32>, vector<32x256xf32> -> vector<32x256xf32>
    %c0_4 = arith.constant 0 : index
    %c0_5 = arith.constant 0 : index
    %4 = vector.load %arg4[%c0_4, %c0_5] : memref<32x1xf32, #tpu.memory_space<vmem>>, vector<32x1xf32>
    %5 = vector.broadcast %4 : vector<32x1xf32> to vector<32x256xf32>
    %6 = arith.addf %3, %5 : vector<32x256xf32>
    %cst_6 = arith.constant 0.000000e+00 : f32
    %7 = vector.broadcast %cst_6 : f32 to vector<32x256xf32>
    %8 = arith.maximumf %6, %7 : vector<32x256xf32>
    %c0_7 = arith.constant 0 : index
    %c0_8 = arith.constant 0 : index
    %9 = vector.load %arg5[%c0_7, %c0_8] : memref<32x32xf32, #tpu.memory_space<vmem>>, vector<32x32xf32>
    %cst_9 = arith.constant dense<0.000000e+00> : vector<32x256xf32>
    %10 = tpu.matmul %9, %8, %cst_9 {dimension_numbers = #tpu.dot_dimension_numbers<[1], [0], [0], [1], [0, 0, 1, 1], [], []>} : vector<32x32xf32>, vector<32x256xf32>, vector<32x256xf32> -> vector<32x256xf32>
    %c0_10 = arith.constant 0 : index
    %c0_11 = arith.constant 0 : index
    %11 = vector.load %arg6[%c0_10, %c0_11] : memref<32x1xf32, #tpu.memory_space<vmem>>, vector<32x1xf32>
    %12 = vector.broadcast %11 : vector<32x1xf32> to vector<32x256xf32>
    %13 = arith.addf %10, %12 : vector<32x256xf32>
    %cst_12 = arith.constant 0.000000e+00 : f32
    %14 = vector.broadcast %cst_12 : f32 to vector<32x256xf32>
    %15 = arith.maximumf %13, %14 : vector<32x256xf32>
    %c0_13 = arith.constant 0 : index
    %c0_14 = arith.constant 0 : index
    %16 = vector.load %arg7[%c0_13, %c0_14] : memref<32x32xf32, #tpu.memory_space<vmem>>, vector<32x32xf32>
    %cst_15 = arith.constant dense<0.000000e+00> : vector<32x256xf32>
    %17 = tpu.matmul %16, %15, %cst_15 {dimension_numbers = #tpu.dot_dimension_numbers<[1], [0], [0], [1], [0, 0, 1, 1], [], []>} : vector<32x32xf32>, vector<32x256xf32>, vector<32x256xf32> -> vector<32x256xf32>
    %c0_16 = arith.constant 0 : index
    %c0_17 = arith.constant 0 : index
    %18 = vector.load %arg8[%c0_16, %c0_17] : memref<32x1xf32, #tpu.memory_space<vmem>>, vector<32x1xf32>
    %19 = vector.broadcast %18 : vector<32x1xf32> to vector<32x256xf32>
    %20 = arith.addf %17, %19 : vector<32x256xf32>
    %21 = vector.extract_strided_slice %20 {offsets = [0, 0], sizes = [16, 256], strides = [1, 1]} : vector<32x256xf32> to vector<16x256xf32>
    %22 = vector.extract_strided_slice %20 {offsets = [16, 0], sizes = [16, 256], strides = [1, 1]} : vector<32x256xf32> to vector<16x256xf32>
    %23 = math.exp %22 : vector<16x256xf32>
    %c0_18 = arith.constant 0 : index
    %c0_19 = arith.constant 0 : index
    %c0_20 = arith.constant 0 : index
    %24 = vector.load %arg9[%c0_18, %c0_19, %c0_20] : memref<1x16x256xf32, #tpu.memory_space<vmem>>, vector<1x16x256xf32>
    %25 = vector.shape_cast %24 : vector<1x16x256xf32> to vector<16x256xf32>
    %26 = arith.mulf %23, %25 : vector<16x256xf32>
    %27 = arith.addf %21, %26 : vector<16x256xf32>
    %c0_21 = arith.constant 0 : index
    %c0_22 = arith.constant 0 : index
    %c0_23 = arith.constant 0 : index
    %28 = vector.load %arg10[%c0_21, %c0_22, %c0_23] : memref<1x16x256xf32, #tpu.memory_space<vmem>>, vector<1x16x256xf32>
    %29 = vector.shape_cast %28 : vector<1x16x256xf32> to vector<16x256xf32>
    %30 = vector.shape_cast %27 : vector<16x256xf32> to vector<1x16x256xf32>
    tpu.vector_store %arg10[%c0_21, %c0_22, %c0_23], %30 {strides = array<i32>} : memref<1x16x256xf32, #tpu.memory_space<vmem>>, vector<1x16x256xf32>,
    %31 = arith.mulf %23, %23 : vector<16x256xf32>
    %32 = arith.mulf %21, %21 : vector<16x256xf32>
    %33 = arith.addf %31, %32 : vector<16x256xf32>
    %34 = arith.subf %33, %22 : vector<16x256xf32>
    %cst_24 = arith.constant 5.000000e-01 : f32
    %35 = vector.broadcast %cst_24 : f32 to vector<16x256xf32>
    %36 = arith.subf %34, %35 : vector<16x256xf32>
    %cst_25 = arith.constant dense<0.000000e+00> : vector<16xf32>
    %37 = vector.multi_reduction <add>, %36, %cst_25 [1] : vector<16x256xf32> to vector<16xf32>
    %38 = vector.shape_cast %37 : vector<16xf32> to vector<16x1xf32>
    %cst_26 = arith.constant dense<0.000000e+00> : vector<1xf32>
    %39 = vector.multi_reduction <add>, %38, %cst_26 [0] : vector<16x1xf32> to vector<1xf32>
    %40 = vector.shape_cast %39 : vector<1xf32> to vector<1x1xf32>
    %41 = vector.shape_cast %40 : vector<1x1xf32> to vector<1x1x1x1xf32>
    %c0_27 = arith.constant 0 : index
    %c0_28 = arith.constant 0 : index
    %c0_29 = arith.constant 0 : index
    %c0_30 = arith.constant 0 : index
    %42 = vector.load %arg11[%c0_27, %c0_28, %c0_29, %c0_30] : memref<1x1x1x1xf32, #tpu.memory_space<vmem>>, vector<1x1x1x1xf32>
    tpu.vector_store %arg11[%c0_27, %c0_28, %c0_29, %c0_30], %41 {strides = array<i32>} : memref<1x1x1x1xf32, #tpu.memory_space<vmem>>, vector<1x1x1x1xf32>,
    return
  }
  func.func @transform_0(%arg0: i32, %arg1: i32) -> (i32, i32, i32) {
    %c0_i32 = arith.constant 0 : i32
    %c0_i32_0 = arith.constant 0 : i32
    return %arg0, %c0_i32, %arg1 : i32, i32, i32
  }
  func.func @transform_1(%arg0: i32, %arg1: i32) -> (i32, i32) {
    %c0_i32 = arith.constant 0 : i32
    %c0_i32_0 = arith.constant 0 : i32
    %c0_i32_1 = arith.constant 0 : i32
    return %c0_i32, %c0_i32_0 : i32, i32
  }
  func.func @transform_2(%arg0: i32, %arg1: i32) -> (i32, i32) {
    %c0_i32 = arith.constant 0 : i32
    %c0_i32_0 = arith.constant 0 : i32
    %c0_i32_1 = arith.constant 0 : i32
    return %c0_i32, %c0_i32_0 : i32, i32
  }
  func.func @transform_3(%arg0: i32, %arg1: i32) -> (i32, i32) {
    %c0_i32 = arith.constant 0 : i32
    %c0_i32_0 = arith.constant 0 : i32
    %c0_i32_1 = arith.constant 0 : i32
    return %c0_i32, %c0_i32_0 : i32, i32
  }
  func.func @transform_4(%arg0: i32, %arg1: i32) -> (i32, i32) {
    %c0_i32 = arith.constant 0 : i32
    %c0_i32_0 = arith.constant 0 : i32
    %c0_i32_1 = arith.constant 0 : i32
    return %c0_i32, %c0_i32_0 : i32, i32
  }
  func.func @transform_5(%arg0: i32, %arg1: i32) -> (i32, i32) {
    %c0_i32 = arith.constant 0 : i32
    %c0_i32_0 = arith.constant 0 : i32
    %c0_i32_1 = arith.constant 0 : i32
    return %c0_i32, %c0_i32_0 : i32, i32
  }
  func.func @transform_6(%arg0: i32, %arg1: i32) -> (i32, i32) {
    %c0_i32 = arith.constant 0 : i32
    %c0_i32_0 = arith.constant 0 : i32
    %c0_i32_1 = arith.constant 0 : i32
    return %c0_i32, %c0_i32_0 : i32, i32
  }
  func.func @transform_7(%arg0: i32, %arg1: i32) -> (i32, i32, i32) {
    %c0_i32 = arith.constant 0 : i32
    %c0_i32_0 = arith.constant 0 : i32
    return %arg0, %c0_i32, %arg1 : i32, i32, i32
  }
  func.func @transform_8(%arg0: i32, %arg1: i32) -> (i32, i32, i32) {
    %c0_i32 = arith.constant 0 : i32
    %c0_i32_0 = arith.constant 0 : i32
    return %arg0, %c0_i32, %arg1 : i32, i32, i32
  }
  func.func @transform_9(%arg0: i32, %arg1: i32) -> (i32, i32, i32, i32) {
    %c0_i32 = arith.constant 0 : i32
    %c0_i32_0 = arith.constant 0 : i32
    %c0_i32_1 = arith.constant 0 : i32
    return %arg0, %arg1, %c0_i32, %c0_i32_0 : i32, i32, i32, i32
  }
}

</mosaic_0001>

<llo_original>
// kernel: tpu_custom_call.1
$region0: #{tpu_custom_call.1}
  #allocation0 [shape = 'u32[]', space=smem, size = 0x4, offset = 0x4, fixed_abs, tag = 'smem constant byte address 0x4 - core index']
  #allocation1 [shape = 'u32[144,128]{1,0:T(1,128)}', space=vmem, size = 0x12000, scoped, tag = 'internal scratch']
  %s0 = inlined_call_operand.hbm [shape: f32[2,64,256], index: 0, kind: input, shape index: {}]
  %s1 = inlined_call_operand.vmem [shape: f32[32,64], index: 1, kind: input, shape index: {}]
  %s2 = inlined_call_operand.vmem [shape: f32[32,1], index: 2, kind: input, shape index: {}]
  %s3 = inlined_call_operand.hbm [shape: f32[32,32], index: 3, kind: input, shape index: {}]
  %s4 = inlined_call_operand.vmem [shape: f32[32,1], index: 4, kind: input, shape index: {}]
  %s5 = inlined_call_operand.hbm [shape: f32[32,32], index: 5, kind: input, shape index: {}]
  %s6 = inlined_call_operand.vmem [shape: f32[32,1], index: 6, kind: input, shape index: {}]
  %s7 = inlined_call_operand.vmem [shape: f32[2,16,256], index: 7, kind: input, shape index: {}]
  %s8 = inlined_call_operand.hbm [shape: f32[2,16,256], index: 8, kind: output, shape index: {0}]
  %s9 = inlined_call_operand.vmem [shape: f32[2,1,1,1], index: 9, kind: output, shape index: {1}]
  %10 = xla_tuple %s8, %s9
  %s11 = sld [smem:[#allocation0]]
  $region85: #{tpu_custom_call.1} parent=0
    _
  %s13 = ssub.s32 1, %s11
  %s14 = scalar_select 0, %s13, %s11
  $region1: #{tpu_custom_call.1} parent=0
    #allocation2 [shape = 'u8[131072]{0}', space=vmem, size = 0x20000, scoped, tag = 'input window, operand 0']
    #allocation3 [shape = 's32[2]{0}', space=sflag, size = 0x8, scoped, tag = 'scoped memory for tpu_custom_call.1']
    #allocation4 [shape = 's32[2]{0}', space=sflag, size = 0x8, scoped, tag = 'scoped memory for tpu_custom_call.1']
    #allocation5 [shape = 'u8[16384]{0}', space=vmem, size = 0x4000, scoped, tag = 'input window, operand 3, single buffered']
    #allocation6 [shape = 's32[1]{0}', space=sflag, size = 0x4, scoped, tag = 'scoped memory for tpu_custom_call.1']
    #allocation7 [shape = 'u8[16384]{0}', space=vmem, size = 0x4000, scoped, tag = 'input window, operand 5, single buffered']
    #allocation8 [shape = 'u8[32768]{0}', space=vmem, size = 0x8000, scoped, tag = 'output window, operand 0']
    %15 = vsyncpa [#allocation3], 0
    %s16 = scalar_lea.sflag [#allocation3], 1
    %17 = vsyncpa %s16, 0
    %18 = vsyncpa [#allocation6], 0
    %19 = vsyncpa [#allocation4], 0
    %s20 = scalar_lea.sflag [#allocation4], 1
    %21 = vsyncpa %s20, 0
    loop: start=0, step=1, limit=4
    $region2: #{tpu_custom_call.1} parent=1 // loop_pre_header
      _
    $region3: #{tpu_custom_call.1} parent=1 // loop_header
      %s23 = sphi 0, %s27
      %p24 = scmp.ge.s32.totalorder %s23, 4
      %s30 = sphi 0, %s42
      %s31 = sphi 0, %s38
      %s32 = sphi 0, %s30
      %s33 = sphi 0, %s31
      %s34 = sphi 0, %s32
      %s35 = sphi 0, %s33
      %s47 = sphi 0, %s49
      %s50 = sphi 0, %s47
      %s51 = sphi 0, %s50
      %s67 = sphi 0, %s51
      %s71 = sphi 0, %s71
      %s73 = sphi 0, %s71
      %s74 = sphi 0, %s73
      %s88 = sphi 0, %s74
      %s92 = sphi 0, %s92
      %s94 = sphi 0, %s92
      %s95 = sphi 0, %s94
      %s109 = sphi 0, %s95
      %s113 = sphi 0, %s113
      %s115 = sphi 0, %s113
      %s116 = sphi 0, %s115
      %s130 = sphi 0, %s116
      %s134 = sphi 0, %s134
      %s136 = sphi 0, %s134
      %s137 = sphi 0, %s136
      %s151 = sphi 0, %s137
      %s155 = sphi 0, %s155
      %s157 = sphi 0, %s155
      %s158 = sphi 0, %s157
      %s172 = sphi 0, %s158
      %s176 = sphi 0, %s176
      %s178 = sphi 0, %s176
      %s179 = sphi 0, %s178
      %s193 = sphi 0, %s179
      %s201 = sphi 0, %s203
      %s204 = sphi 0, %s201
      %s205 = sphi 0, %s204
      %s221 = sphi 0, %s205
      %s229 = sphi 0, %s231
      %s232 = sphi 0, %s229
      %s233 = sphi 0, %s232
      %s249 = sphi 0, %s233
      %s257 = sphi 0, %s259
      %s260 = sphi 0, %s257
      %s261 = sphi 0, %s260
      %s277 = sphi 0, %s261
    $region4: #{tpu_custom_call.1} parent=1 // loop_header_branch
      %26 = sbr.rel (%p24) target = $region8
    $region5: #{tpu_custom_call.1} parent=1 // loop_body
      %s28 = ssub.s32 %s23, 1
      %s29 = ssub.s32 %s23, 2
      %s36 = sadd.s32 1, %s31
      %p37 = scmp.ge.s32.totalorder %s36, 1
      %s38 = scalar_select %p37, 0, %s36
      %s39 = sadd.s32 1, %s30
      %s40 = scalar_select %p37, %s39, %s30
      %p41 = scmp.ge.s32.totalorder %s40, 2
      %s42 = scalar_select %p41, 0, %s40
      %s43 = ssub.s32 %s30, %s42
      %s44 = ssub.s32 %s31, %s38
      %s45 = sor.u32 %s43, %s44
      %p46 = scmp.eq.s32.totalorder %s45, 0
      %s48 = sadd.s32 %s47, 1
      %s49 = scalar_select %p46, %s47, %s48
      %p52 = pneg %p46
      %p53 = scmp.eq.s32.totalorder %s23, 1
      %p54 = por %p52, %p53
      %p55 = scmp.ne.s32.totalorder %s47, %s50
      %p56 = scmp.eq.s32.totalorder %s23, 0
      %p57 = por %p55, %p56
      %p58 = scmp.ne.s32.totalorder %s47, %s50
      %p59 = scmp.eq.s32.totalorder %s28, 1
      %p60 = por %p58, %p59
      %p61 = scmp.ne.s32.totalorder %s50, %s51
      %p62 = scmp.eq.s32.totalorder %s28, 0
      %p63 = por %p61, %p62
      %p64 = scmp.ne.s32.totalorder %s50, %s51
      %p65 = scmp.eq.s32.totalorder %s29, 1
      %p66 = por %p64, %p65
      %p68 = scmp.ne.s32.totalorder %s51, %s67
      %p69 = scmp.eq.s32.totalorder %s29, 0
      %p70 = por %p68, %p69
      %s72 = sadd.s32 %s71, 1
      %p75 = scmp.eq.s32.totalorder %s23, 1
      %p76 = scmp.ne.s32.totalorder %s71, %s73
      %p77 = scmp.eq.s32.totalorder %s23, 0
      %p78 = por %p76, %p77
      %p79 = scmp.ne.s32.totalorder %s71, %s73
      %p80 = scmp.eq.s32.totalorder %s28, 1
      %p81 = por %p79, %p80
      %p82 = scmp.ne.s32.totalorder %s73, %s74
      %p83 = scmp.eq.s32.totalorder %s28, 0
      %p84 = por %p82, %p83
      %p85 = scmp.ne.s32.totalorder %s73, %s74
      %p86 = scmp.eq.s32.totalorder %s29, 1
      %p87 = por %p85, %p86
      %p89 = scmp.ne.s32.totalorder %s74, %s88
      %p90 = scmp.eq.s32.totalorder %s29, 0
      %p91 = por %p89, %p90
      %s93 = sadd.s32 %s92, 1
      %p96 = scmp.eq.s32.totalorder %s23, 1
      %p97 = scmp.ne.s32.totalorder %s92, %s94
      %p98 = scmp.eq.s32.totalorder %s23, 0
      %p99 = por %p97, %p98
      %p100 = scmp.ne.s32.totalorder %s92, %s94
      %p101 = scmp.eq.s32.totalorder %s28, 1
      %p102 = por %p100, %p101
      %p103 = scmp.ne.s32.totalorder %s94, %s95
      %p104 = scmp.eq.s32.totalorder %s28, 0
      %p105 = por %p103, %p104
      %p106 = scmp.ne.s32.totalorder %s94, %s95
      %p107 = scmp.eq.s32.totalorder %s29, 1
      %p108 = por %p106, %p107
      %p110 = scmp.ne.s32.totalorder %s95, %s109
      %p111 = scmp.eq.s32.totalorder %s29, 0
      %p112 = por %p110, %p111
      %s114 = sadd.s32 %s113, 1
      %p117 = scmp.eq.s32.totalorder %s23, 1
      %p118 = scmp.ne.s32.totalorder %s113, %s115
      %p119 = scmp.eq.s32.totalorder %s23, 0
      %p120 = por %p118, %p119
      %p121 = scmp.ne.s32.totalorder %s113, %s115
      %p122 = scmp.eq.s32.totalorder %s28, 1
      %p123 = por %p121, %p122
      %p124 = scmp.ne.s32.totalorder %s115, %s116
      %p125 = scmp.eq.s32.totalorder %s28, 0
      %p126 = por %p124, %p125
      %p127 = scmp.ne.s32.totalorder %s115, %s116
      %p128 = scmp.eq.s32.totalorder %s29, 1
      %p129 = por %p127, %p128
      %p131 = scmp.ne.s32.totalorder %s116, %s130
      %p132 = scmp.eq.s32.totalorder %s29, 0
      %p133 = por %p131, %p132
      %s135 = sadd.s32 %s134, 1
      %p138 = scmp.eq.s32.totalorder %s23, 1
      %p139 = scmp.ne.s32.totalorder %s134, %s136
      %p140 = scmp.eq.s32.totalorder %s23, 0
      %p141 = por %p139, %p140
      %p142 = scmp.ne.s32.totalorder %s134, %s136
      %p143 = scmp.eq.s32.totalorder %s28, 1
      %p144 = por %p142, %p143
      %p145 = scmp.ne.s32.totalorder %s136, %s137
      %p146 = scmp.eq.s32.totalorder %s28, 0
      %p147 = por %p145, %p146
      %p148 = scmp.ne.s32.totalorder %s136, %s137
      %p149 = scmp.eq.s32.totalorder %s29, 1
      %p150 = por %p148, %p149
      %p152 = scmp.ne.s32.totalorder %s137, %s151
      %p153 = scmp.eq.s32.totalorder %s29, 0
      %p154 = por %p152, %p153
      %s156 = sadd.s32 %s155, 1
      %p159 = scmp.eq.s32.totalorder %s23, 1
      %p160 = scmp.ne.s32.totalorder %s155, %s157
      %p161 = scmp.eq.s32.totalorder %s23, 0
      %p162 = por %p160, %p161
      %p163 = scmp.ne.s32.totalorder %s155, %s157
      %p164 = scmp.eq.s32.totalorder %s28, 1
      %p165 = por %p163, %p164
      %p166 = scmp.ne.s32.totalorder %s157, %s158
      %p167 = scmp.eq.s32.totalorder %s28, 0
      %p168 = por %p166, %p167
      %p169 = scmp.ne.s32.totalorder %s157, %s158
      %p170 = scmp.eq.s32.totalorder %s29, 1
      %p171 = por %p169, %p170
      %p173 = scmp.ne.s32.totalorder %s158, %s172
      %p174 = scmp.eq.s32.totalorder %s29, 0
      %p175 = por %p173, %p174
      %s177 = sadd.s32 %s176, 1
      %p180 = scmp.eq.s32.totalorder %s23, 1
      %p181 = scmp.ne.s32.totalorder %s176, %s178
      %p182 = scmp.eq.s32.totalorder %s23, 0
      %p183 = por %p181, %p182
      %p184 = scmp.ne.s32.totalorder %s176, %s178
      %p185 = scmp.eq.s32.totalorder %s28, 1
      %p186 = por %p184, %p185
      %p187 = scmp.ne.s32.totalorder %s178, %s179
      %p188 = scmp.eq.s32.totalorder %s28, 0
      %p189 = por %p187, %p188
      %p190 = scmp.ne.s32.totalorder %s178, %s179
      %p191 = scmp.eq.s32.totalorder %s29, 1
      %p192 = por %p190, %p191
      %p194 = scmp.ne.s32.totalorder %s179, %s193
      %p195 = scmp.eq.s32.totalorder %s29, 0
      %p196 = por %p194, %p195
      %s197 = ssub.s32 %s30, %s42
      %s198 = ssub.s32 %s31, %s38
      %s199 = sor.u32 %s197, %s198
      %p200 = scmp.eq.s32.totalorder %s199, 0
      %s202 = sadd.s32 %s201, 1
      %s203 = scalar_select %p200, %s201, %s202
      %p206 = pneg %p200
      %p207 = scmp.eq.s32.totalorder %s23, 1
      %p208 = por %p206, %p207
      %p209 = scmp.ne.s32.totalorder %s201, %s204
      %p210 = scmp.eq.s32.totalorder %s23, 0
      %p211 = por %p209, %p210
      %p212 = scmp.ne.s32.totalorder %s201, %s204
      %p213 = scmp.eq.s32.totalorder %s28, 1
      %p214 = por %p212, %p213
      %p215 = scmp.ne.s32.totalorder %s204, %s205
      %p216 = scmp.eq.s32.totalorder %s28, 0
      %p217 = por %p215, %p216
      %p218 = scmp.ne.s32.totalorder %s204, %s205
      %p219 = scmp.eq.s32.totalorder %s29, 1
      %p220 = por %p218, %p219
      %p222 = scmp.ne.s32.totalorder %s205, %s221
      %p223 = scmp.eq.s32.totalorder %s29, 0
      %p224 = por %p222, %p223
      %s225 = ssub.s32 %s30, %s42
      %s226 = ssub.s32 %s31, %s38
      %s227 = sor.u32 %s225, %s226
      %p228 = scmp.eq.s32.totalorder %s227, 0
      %s230 = sadd.s32 %s229, 1
      %s231 = scalar_select %p228, %s229, %s230
      %p234 = pneg %p228
      %p235 = scmp.eq.s32.totalorder %s23, 1
      %p236 = por %p234, %p235
      %p237 = scmp.ne.s32.totalorder %s229, %s232
      %p238 = scmp.eq.s32.totalorder %s23, 0
      %p239 = por %p237, %p238
      %p240 = scmp.ne.s32.totalorder %s229, %s232
      %p241 = scmp.eq.s32.totalorder %s28, 1
      %p242 = por %p240, %p241
      %p243 = scmp.ne.s32.totalorder %s232, %s233
      %p244 = scmp.eq.s32.totalorder %s28, 0
      %p245 = por %p243, %p244
      %p246 = scmp.ne.s32.totalorder %s232, %s233
      %p247 = scmp.eq.s32.totalorder %s29, 1
      %p248 = por %p246, %p247
      %p250 = scmp.ne.s32.totalorder %s233, %s249
      %p251 = scmp.eq.s32.totalorder %s29, 0
      %p252 = por %p250, %p251
      %s253 = ssub.s32 %s30, %s42
      %s254 = ssub.s32 %s31, %s38
      %s255 = sor.u32 %s253, %s254
      %p256 = scmp.eq.s32.totalorder %s255, 0
      %s258 = sadd.s32 %s257, 1
      %s259 = scalar_select %p256, %s257, %s258
      %p262 = pneg %p256
      %p263 = scmp.eq.s32.totalorder %s23, 1
      %p264 = por %p262, %p263
      %p265 = scmp.ne.s32.totalorder %s257, %s260
      %p266 = scmp.eq.s32.totalorder %s23, 0
      %p267 = por %p265, %p266
      %p268 = scmp.ne.s32.totalorder %s257, %s260
      %p269 = scmp.eq.s32.totalorder %s28, 1
      %p270 = por %p268, %p269
      %p271 = scmp.ne.s32.totalorder %s260, %s261
      %p272 = scmp.eq.s32.totalorder %s28, 0
      %p273 = por %p271, %p272
      %p274 = scmp.ne.s32.totalorder %s260, %s261
      %p275 = scmp.eq.s32.totalorder %s29, 1
      %p276 = por %p274, %p275
      %p278 = scmp.ne.s32.totalorder %s261, %s277
      %p279 = scmp.eq.s32.totalorder %s29, 0
      %p280 = por %p278, %p279
      %p281 = scmp.le.s32.totalorder 1, %s23
      %p282 = scmp.lt.s32.totalorder %s23, 3
      %p283 = pnand %p281, %p282
      %p284 = pneg %p283
      // Predicated region
      $region9: #{tpu_custom_call.1} parent=5 // pred_check
        _
      $region10: #{tpu_custom_call.1} parent=5 // pred_check_branch
        %286 = sbr.rel (%p283) target = $region12
      $region11: #{tpu_custom_call.1} parent=5 // pred_region
        %s287 = ssub.s32 %s23, 1
        // Predicated region
        $region13: #{tpu_custom_call.1} parent=11 // pred_check
          %p288 = pneg %p84
        $region14: #{tpu_custom_call.1} parent=11 // pred_check_branch
          %290 = sbr.rel (%p288) target = $region16
        $region15: #{tpu_custom_call.1} parent=11 // pred_region
          _
        $region16: #{tpu_custom_call.1} parent=11 // pred_fallthru
          _
        // Predicated region
        $region17: #{tpu_custom_call.1} parent=11 // pred_check
          %p291 = pneg %p105
        $region18: #{tpu_custom_call.1} parent=11 // pred_check_branch
          %293 = sbr.rel (%p291) target = $region20
        $region19: #{tpu_custom_call.1} parent=11 // pred_region
          _
        $region20: #{tpu_custom_call.1} parent=11 // pred_fallthru
          _
        // Predicated region
        $region21: #{tpu_custom_call.1} parent=11 // pred_check
          %p294 = pneg %p126
        $region22: #{tpu_custom_call.1} parent=11 // pred_check_branch
          %296 = sbr.rel (%p294) target = $region24
        $region23: #{tpu_custom_call.1} parent=11 // pred_region
          %s298 = ssub.s32 512, 512
          %299 = vsyncadd [#allocation6], %s298
          %s300 = sshll.u32 [#allocation5], 4
          %s301 = int_to_ptr.vmem [resolvable:$true] %s300
          %306 = dma.hbm_to_vmem [thread:$0]  %s3, 512, %s301, [#allocation6], 128, 128, 8
        $region24: #{tpu_custom_call.1} parent=11 // pred_fallthru
          _
        // Predicated region
        $region25: #{tpu_custom_call.1} parent=11 // pred_check
          %p307 = pneg %p147
        $region26: #{tpu_custom_call.1} parent=11 // pred_check_branch
          %309 = sbr.rel (%p307) target = $region28
        $region27: #{tpu_custom_call.1} parent=11 // pred_region
          _
        $region28: #{tpu_custom_call.1} parent=11 // pred_fallthru
          _
        // Predicated region
        $region29: #{tpu_custom_call.1} parent=11 // pred_check
          %p310 = pneg %p168
        $region30: #{tpu_custom_call.1} parent=11 // pred_check_branch
          %312 = sbr.rel (%p310) target = $region32
        $region31: #{tpu_custom_call.1} parent=11 // pred_region
          %s314 = ssub.s32 512, 512
          %315 = vsyncadd [#allocation6], %s314
          %s316 = sshll.u32 [#allocation7], 4
          %s317 = int_to_ptr.vmem [resolvable:$true] %s316
          %322 = dma.hbm_to_vmem [thread:$0]  %s5, 512, %s317, [#allocation6], 128, 128, 8
        $region32: #{tpu_custom_call.1} parent=11 // pred_fallthru
          _
        // Predicated region
        $region33: #{tpu_custom_call.1} parent=11 // pred_check
          %p323 = pneg %p189
        $region34: #{tpu_custom_call.1} parent=11 // pred_check_branch
          %325 = sbr.rel (%p323) target = $region36
        $region35: #{tpu_custom_call.1} parent=11 // pred_region
          _
        $region36: #{tpu_custom_call.1} parent=11 // pred_fallthru
          _
      $region12: #{tpu_custom_call.1} parent=5 // pred_fallthru
        _
      %p326 = scmp.lt.s32.totalorder %s23, 2
      // Predicated region
      $region37: #{tpu_custom_call.1} parent=5 // pred_check
        %p327 = pneg %p326
      $region38: #{tpu_custom_call.1} parent=5 // pred_check_branch
        %329 = sbr.rel (%p327) target = $region40
      $region39: #{tpu_custom_call.1} parent=5 // pred_region
        // Predicated region
        $region41: #{tpu_custom_call.1} parent=39 // pred_check
          %p330 = pneg %p57
        $region42: #{tpu_custom_call.1} parent=39 // pred_check_branch
          %332 = sbr.rel (%p330) target = $region44
        $region43: #{tpu_custom_call.1} parent=39 // pred_region
          %s333 = sand.u32 %s47, 1
          %s334 = scalar_lea.sflag [#allocation3], %s333
          %s335 = sand.u32 %s47, 1
          %s336 = smul.addr %s335, 128
          %s337 = scalar_lea.vmem [#allocation2], %s336
          %s338 = smul.u32 2, %s31
          %s340 = ssub.s32 2048, 2048
          %341 = vsyncadd %s334, %s340
          %s342 = smul.addr %s30, 16
          %s343 = sadd.s32 %s338, %s342
          %s344 = smul.addr %s343, 128
          %s345 = scalar_lea.hbm %s0, %s344
          %s346 = sshll.u32 %s337, 4
          %s347 = int_to_ptr.vmem [resolvable:$true] %s346
          %352 = dma.hbm_to_vmem [thread:$0]  %s345, 2048, %s347, %s334, 256, 256, 16
        $region44: #{tpu_custom_call.1} parent=39 // pred_fallthru
          _
        // Predicated region
        $region45: #{tpu_custom_call.1} parent=39 // pred_check
          %p353 = pneg %p211
        $region46: #{tpu_custom_call.1} parent=39 // pred_check_branch
          %355 = sbr.rel (%p353) target = $region48
        $region47: #{tpu_custom_call.1} parent=39 // pred_region
          %s356 = smul.u32 2, %s31
          %p357 = scmp.lt.s32.totalorder %s30, 1
          %s358 = scalar_select %p357, %s30, 1
          %p359 = scmp.lt.s32.totalorder %s356, 1
          %s360 = scalar_select %p359, %s356, 1
          %s361 = smul.addr %s358, 4
          %s362 = sadd.s32 %s360, %s361
          %s363 = smul.addr %s362, 8
          %s364 = scalar_lea.vmem %s7, %s363
          %s365 = smul.u32 2, %s31
        $region48: #{tpu_custom_call.1} parent=39 // pred_fallthru
          _
      $region40: #{tpu_custom_call.1} parent=5 // pred_fallthru
        _
      %p366 = scmp.le.s32.totalorder 1, %s23
      %p367 = scmp.lt.s32.totalorder %s23, 3
      %p368 = pnand %p366, %p367
      %p369 = pneg %p368
      // Predicated region
      $region49: #{tpu_custom_call.1} parent=5 // pred_check
        _
      $region50: #{tpu_custom_call.1} parent=5 // pred_check_branch
        %371 = sbr.rel (%p368) target = $region52
      $region51: #{tpu_custom_call.1} parent=5 // pred_region
        %s372 = ssub.s32 %s23, 1
        %s373 = sand.u32 %s50, 1
        %s374 = scalar_lea.sflag [#allocation3], %s373
        %s375 = sand.u32 %s50, 1
        %s376 = smul.addr %s375, 128
        %s377 = scalar_lea.vmem [#allocation2], %s376
        // Predicated region
        $region53: #{tpu_custom_call.1} parent=51 // pred_check
          %p378 = pneg %p63
        $region54: #{tpu_custom_call.1} parent=51 // pred_check_branch
          %380 = sbr.rel (%p378) target = $region56
        $region55: #{tpu_custom_call.1} parent=51 // pred_region
          %381 = dma.done %s374, 2048
        $region56: #{tpu_custom_call.1} parent=51 // pred_fallthru
          _
        // Predicated region
        $region57: #{tpu_custom_call.1} parent=51 // pred_check
          %p382 = pneg %p126
        $region58: #{tpu_custom_call.1} parent=51 // pred_check_branch
          %384 = sbr.rel (%p382) target = $region60
        $region59: #{tpu_custom_call.1} parent=51 // pred_region
          %385 = dma.done [#allocation6], 512
        $region60: #{tpu_custom_call.1} parent=51 // pred_fallthru
          _
        // Predicated region
        $region61: #{tpu_custom_call.1} parent=51 // pred_check
          %p386 = pneg %p168
        $region62: #{tpu_custom_call.1} parent=51 // pred_check_branch
          %388 = sbr.rel (%p386) target = $region64
        $region63: #{tpu_custom_call.1} parent=51 // pred_region
          %389 = dma.done [#allocation6], 512
        $region64: #{tpu_custom_call.1} parent=51 // pred_fallthru
          _
        %s390 = sand.u32 %s50, 1
        %s391 = scalar_lea.sflag [#allocation3], %s390
        %s392 = sand.u32 %s50, 1
        %s393 = smul.addr %s392, 128
        %s394 = scalar_lea.vmem [#allocation2], %s393
        %p395 = pneg %p63
        %p396 = pneg %p60
        %p397 = pneg %p84
        %p398 = pneg %p81
        %p399 = pneg %p105
        %p400 = pneg %p102
        %p401 = pneg %p126
        %p402 = pneg %p123
        %p403 = pneg %p147
        %p404 = pneg %p144
        %p405 = pneg %p168
        %p406 = pneg %p165
        %p407 = pneg %p189
        %p408 = pneg %p186
        %s409 = smul.u32 2, %s33
        %p410 = scmp.lt.s32.totalorder %s32, 1
        %s411 = scalar_select %p410, %s32, 1
        %p412 = scmp.lt.s32.totalorder %s409, 1
        %s413 = scalar_select %p412, %s409, 1
        %s414 = smul.addr %s411, 4
        %s415 = sadd.s32 %s413, %s414
        %s416 = smul.addr %s415, 8
        %s417 = scalar_lea.vmem %s7, %s416
        %p418 = pneg %p217
        %p419 = pneg %p214
        %p420 = pneg %p245
        %p421 = pneg %p242
        %s422 = sand.u32 %s232, 1
        %s423 = scalar_lea.sflag [#allocation4], %s422
        %s424 = sand.u32 %s232, 1
        %s425 = smul.addr %s424, 32
        %s426 = scalar_lea.vmem [#allocation8], %s425
        %p427 = pneg %p273
        %p428 = pneg %p270
        %p429 = scmp.lt.s32.totalorder %s32, 1
        %s430 = scalar_select %p429, %s32, 1
        %p431 = scmp.lt.s32.totalorder %s33, 0
        %s432 = scalar_select %p431, %s33, 0
        %s433 = sadd.s32 %s432, %s430
        %s434 = scalar_lea.vmem %s9, %s433
        %s435 = smul.u32 2, %s33
        %s436 = smul.u32 2, %s33
        %p437 = scmp.lt.s32.totalorder %s32, 1
        %s438 = scalar_select %p437, %s32, 1
        %p439 = scmp.lt.s32.totalorder %s436, 1
        %s440 = scalar_select %p439, %s436, 1
        %s441 = smul.addr %s438, 4
        %s442 = sadd.s32 %s440, %s441
        %s443 = smul.addr %s442, 8
        %s444 = scalar_lea.vmem %s7, %s443
        %s445 = smul.u32 2, %s33
        %s446 = smul.u32 2, %s33
        %p447 = scmp.lt.s32.totalorder %s32, 1
        %s448 = scalar_select %p447, %s32, 1
        %p449 = scmp.lt.s32.totalorder %s33, 0
        %s450 = scalar_select %p449, %s33, 0
        %s451 = sadd.s32 %s450, %s448
        %s452 = scalar_lea.vmem %s9, %s451
        %v453 = vld [vmem:[%s377] sm:$0xff]
        %v454 = vld [vmem:[%s377 + $0x8] sm:$0xff]
        %v455 = vld [vmem:[%s377 + $0x10] sm:$0xff]
        %v456 = vld [vmem:[%s377 + $0x18] sm:$0xff]
        %v457 = vld [vmem:[%s377 + $0x20] sm:$0xff]
        %v458 = vld [vmem:[%s377 + $0x28] sm:$0xff]
        %v459 = vld [vmem:[%s377 + $0x30] sm:$0xff]
        %v460 = vld [vmem:[%s377 + $0x38] sm:$0xff]
        %v461 = vld [vmem:[%s377 + $0x40] sm:$0xff]
        %v462 = vld [vmem:[%s377 + $0x48] sm:$0xff]
        %v463 = vld [vmem:[%s377 + $0x50] sm:$0xff]
        %v464 = vld [vmem:[%s377 + $0x58] sm:$0xff]
        %v465 = vld [vmem:[%s377 + $0x60] sm:$0xff]
        %v466 = vld [vmem:[%s377 + $0x68] sm:$0xff]
        %v467 = vld [vmem:[%s377 + $0x70] sm:$0xff]
        %v468 = vld [vmem:[%s377 + $0x78] sm:$0xff]
        %v469 = vld [vmem:[%s1] sm:$0xff]
        %v470 = vld [vmem:[%s1 + $0x8] sm:$0xff]
        %v471 = vld [vmem:[%s1 + $0x10] sm:$0xff]
        %v472 = vld [vmem:[%s1 + $0x18] sm:$0xff]
        %v473 = vld [vmem:[%s2] sm:$0xff]
        %v474 = vld [vmem:[%s2 + $0x8] sm:$0xff]
        %v475 = vld [vmem:[%s2 + $0x10] sm:$0xff]
        %v476 = vld [vmem:[%s2 + $0x18] sm:$0xff]
        %478 = vset.pattern.permute.xlu0 0
        %479 = vperm.xlu0 %478, %v473
        %v480 = vpop.permute.xlu0 %479
        %483 = vset.pattern.permute.xlu0 0
        %484 = vperm.xlu0 %483, %v474
        %v485 = vpop.permute.xlu0 %484
        %488 = vset.pattern.permute.xlu0 0
        %489 = vperm.xlu0 %488, %v475
        %v490 = vpop.permute.xlu0 %489
        %493 = vset.pattern.permute.xlu0 0
        %494 = vperm.xlu0 %493, %v476
        %v495 = vpop.permute.xlu0 %494
        %vm497 = vcmask 523264
        %v499 = vsel %vm497, %v469, 0
        %v502 = vsel %vm497, %v470, 0
        %v505 = vsel %vm497, %v471, 0
        %v508 = vsel %vm497, %v472, 0
        %510 = vmatprep.subr.mxu0 0.0
        %511 = vmatpush1.msra.mxu0 0.0
        %512 = vmatprep.subr.mxu0 0.0
        %513 = vmatpush1.msra.mxu0 0.0
        %514 = vmatprep.subr.mxu0 0.0
        %515 = vmatpush1.msra.mxu0 0.0
        %516 = vmatprep.subr.mxu0 0.0
        %517 = vmatpush1.msra.mxu0 0.0
        %518 = vmatprep.subr.mxu0 0.0
        %519 = vmatpush1.msra.mxu0 0.0
        %520 = vmatprep.subr.mxu0 0.0
        %521 = vmatpush1.msra.mxu0 0.0
        %522 = vmatprep.subr.mxu0 0.0
        %523 = vmatpush1.msra.mxu0 0.0
        %524 = vmatprep.subr.mxu0 0.0
        %525 = vmatpush1.msra.mxu0 0.0
        %526 = vmatprep.subr.mxu0 %v468
        %527 = vmatpush1.msra.mxu0 %v467
        %528 = vmatprep.subr.mxu0 %v466
        %529 = vmatpush1.msra.mxu0 %v465
        %530 = vmatprep.subr.mxu0 %v464
        %531 = vmatpush1.msra.mxu0 %v463
        %532 = vmatprep.subr.mxu0 %v462
        %533 = vmatpush1.msra.mxu0 %v461
        %534 = vmatprep.subr.mxu0 %v460
        %535 = vmatpush1.msra.mxu0 %v459
        %536 = vmatprep.subr.mxu0 %v458
        %537 = vmatpush1.msra.mxu0 %v457
        %538 = vmatprep.subr.mxu0 %v456
        %539 = vmatpush1.msra.mxu0 %v455
        %540 = vmatprep.subr.mxu0 %v454
        %541 = vmatpush1.msra.mxu0 %v453
        %542 = vmatprep.subr.mxu0 0.0
        %543 = vmatpush2.msra.mxu0 0.0
        %544 = vmatprep.subr.mxu0 0.0
        %545 = vmatpush2.msra.mxu0 0.0
        %546 = vmatprep.subr.mxu0 0.0
        %547 = vmatpush2.msra.mxu0 0.0
        %548 = vmatprep.subr.mxu0 0.0
        %549 = vmatpush2.msra.mxu0 0.0
        %550 = vmatprep.subr.mxu0 0.0
        %551 = vmatpush2.msra.mxu0 0.0
        %552 = vmatprep.subr.mxu0 0.0
        %553 = vmatpush2.msra.mxu0 0.0
        %554 = vmatprep.subr.mxu0 0.0
        %555 = vmatpush2.msra.mxu0 0.0
        %556 = vmatprep.subr.mxu0 0.0
        %557 = vmatpush2.msra.mxu0 0.0
        %558 = vmatprep.subr.mxu0 0.0
        %559 = vmatpush2.msra.mxu0 0.0
        %560 = vmatprep.subr.mxu0 0.0
        %561 = vmatpush2.msra.mxu0 0.0
        %562 = vmatprep.subr.mxu0 0.0
        %563 = vmatpush2.msra.mxu0 0.0
        %564 = vmatprep.subr.mxu0 0.0
        %565 = vmatpush2.msra.mxu0 0.0
        %566 = vmatprep.subr.mxu0 0.0
        %567 = vmatpush2.msra.mxu0 0.0
        %568 = vmatprep.subr.mxu0 0.0
        %569 = vmatpush2.msra.mxu0 0.0
        %570 = vmatprep.subr.mxu0 0.0
        %571 = vmatpush2.msra.mxu0 0.0
        %572 = vmatprep.subr.mxu0 0.0
        %573 = vmatpush2.msra.mxu0 0.0
        %574 = vmatprep.mubr.f32.mxu0 0.0
        %575 = vmatmul.mubr.f32.gmra.mxu0 %v499
        %v576 = vpop.f32.mrf.mxu0
        %v577 = vadd.f32 %v480, %v576
        %v578 = vpop.f32.mrf.mxu0
        %v579 = vadd.f32 %v480, %v578
        %580 = vmatprep.mubr.f32.mxu0 0.0
        %581 = vmatmul.mubr.f32.gmra.mxu0 %v502
        %v582 = vpop.f32.mrf.mxu0
        %v583 = vadd.f32 %v485, %v582
        %v584 = vpop.f32.mrf.mxu0
        %v585 = vadd.f32 %v485, %v584
        %586 = vmatprep.mubr.f32.mxu0 0.0
        %587 = vmatmul.mubr.f32.gmra.mxu0 %v505
        %v588 = vpop.f32.mrf.mxu0
        %v589 = vadd.f32 %v490, %v588
        %v590 = vpop.f32.mrf.mxu0
        %v591 = vadd.f32 %v490, %v590
        %592 = vmatprep.mubr.f32.mxu0 0.0
        %593 = vmatmul.mubr.f32.gmra.mxu0 %v508
        %v594 = vpop.f32.mrf.mxu0
        %v595 = vadd.f32 %v495, %v594
        %v596 = vpop.f32.mrf.mxu0
        %v597 = vadd.f32 %v495, %v596
        %598 = vdwg.mxu0
        %v599 = vmax.f32 %v577, 0.0
        %v600 = vmax.f32 %v579, 0.0
        %v601 = vmax.f32 %v583, 0.0
        %v602 = vmax.f32 %v585, 0.0
        %v603 = vmax.f32 %v589, 0.0
        %v604 = vmax.f32 %v591, 0.0
        %v605 = vmax.f32 %v595, 0.0
        %v606 = vmax.f32 %v597, 0.0
        %v607 = vld [vmem:[#allocation5] sm:$0xff]
        %v608 = vld [vmem:[#allocation5 + $0x8] sm:$0xff]
        %v609 = vld [vmem:[#allocation5 + $0x10] sm:$0xff]
        %v610 = vld [vmem:[#allocation5 + $0x18] sm:$0xff]
        %v611 = vld [vmem:[%s4] sm:$0xff]
        %v612 = vld [vmem:[%s4 + $0x8] sm:$0xff]
        %v613 = vld [vmem:[%s4 + $0x10] sm:$0xff]
        %v614 = vld [vmem:[%s4 + $0x18] sm:$0xff]
        %616 = vset.pattern.permute.xlu0 0
        %617 = vperm.xlu0 %616, %v611
        %v618 = vpop.permute.xlu0 %617
        %621 = vset.pattern.permute.xlu0 0
        %622 = vperm.xlu0 %621, %v612
        %v623 = vpop.permute.xlu0 %622
        %626 = vset.pattern.permute.xlu0 0
        %627 = vperm.xlu0 %626, %v613
        %v628 = vpop.permute.xlu0 %627
        %631 = vset.pattern.permute.xlu0 0
        %632 = vperm.xlu0 %631, %v614
        %v633 = vpop.permute.xlu0 %632
        %vm635 = vcmask 261120
        %v637 = vsel %vm635, %v607, 0
        %v640 = vsel %vm635, %v608, 0
        %v643 = vsel %vm635, %v609, 0
        %v646 = vsel %vm635, %v610, 0
        %648 = vmatprep.subr.mxu0 0.0
        %649 = vmatpush1.msra.mxu0 0.0
        %650 = vmatprep.subr.mxu0 0.0
        %651 = vmatpush1.msra.mxu0 0.0
        %652 = vmatprep.subr.mxu0 0.0
        %653 = vmatpush1.msra.mxu0 0.0
        %654 = vmatprep.subr.mxu0 0.0
        %655 = vmatpush1.msra.mxu0 0.0
        %656 = vmatprep.subr.mxu0 0.0
        %657 = vmatpush1.msra.mxu0 0.0
        %658 = vmatprep.subr.mxu0 0.0
        %659 = vmatpush1.msra.mxu0 0.0
        %660 = vmatprep.subr.mxu0 0.0
        %661 = vmatpush1.msra.mxu0 0.0
        %662 = vmatprep.subr.mxu0 0.0
        %663 = vmatpush1.msra.mxu0 0.0
        %664 = vmatprep.subr.mxu0 0.0
        %665 = vmatpush1.msra.mxu0 0.0
        %666 = vmatprep.subr.mxu0 0.0
        %667 = vmatpush1.msra.mxu0 0.0
        %668 = vmatprep.subr.mxu0 0.0
        %669 = vmatpush1.msra.mxu0 0.0
        %670 = vmatprep.subr.mxu0 0.0
        %671 = vmatpush1.msra.mxu0 0.0
        %672 = vmatprep.subr.mxu0 %v606
        %673 = vmatpush1.msra.mxu0 %v605
        %674 = vmatprep.subr.mxu0 %v604
        %675 = vmatpush1.msra.mxu0 %v603
        %676 = vmatprep.subr.mxu0 %v602
        %677 = vmatpush1.msra.mxu0 %v601
        %678 = vmatprep.subr.mxu0 %v600
        %679 = vmatpush1.msra.mxu0 %v599
        %680 = vmatprep.subr.mxu0 0.0
        %681 = vmatpush2.msra.mxu0 0.0
        %682 = vmatprep.subr.mxu0 0.0
        %683 = vmatpush2.msra.mxu0 0.0
        %684 = vmatprep.subr.mxu0 0.0
        %685 = vmatpush2.msra.mxu0 0.0
        %686 = vmatprep.subr.mxu0 0.0
        %687 = vmatpush2.msra.mxu0 0.0
        %688 = vmatprep.subr.mxu0 0.0
        %689 = vmatpush2.msra.mxu0 0.0
        %690 = vmatprep.subr.mxu0 0.0
        %691 = vmatpush2.msra.mxu0 0.0
        %692 = vmatprep.subr.mxu0 0.0
        %693 = vmatpush2.msra.mxu0 0.0
        %694 = vmatprep.subr.mxu0 0.0
        %695 = vmatpush2.msra.mxu0 0.0
        %696 = vmatprep.subr.mxu0 0.0
        %697 = vmatpush2.msra.mxu0 0.0
        %698 = vmatprep.subr.mxu0 0.0
        %699 = vmatpush2.msra.mxu0 0.0
        %700 = vmatprep.subr.mxu0 0.0
        %701 = vmatpush2.msra.mxu0 0.0
        %702 = vmatprep.subr.mxu0 0.0
        %703 = vmatpush2.msra.mxu0 0.0
        %704 = vmatprep.subr.mxu0 0.0
        %705 = vmatpush2.msra.mxu0 0.0
        %706 = vmatprep.subr.mxu0 0.0
        %707 = vmatpush2.msra.mxu0 0.0
        %708 = vmatprep.subr.mxu0 0.0
        %709 = vmatpush2.msra.mxu0 0.0
        %710 = vmatprep.subr.mxu0 0.0
        %711 = vmatpush2.msra.mxu0 0.0
        %712 = vmatprep.mubr.f32.mxu0 0.0
        %713 = vmatmul.mubr.f32.gmra.mxu0 %v637
        %v714 = vpop.f32.mrf.mxu0
        %v715 = vadd.f32 %v618, %v714
        %v716 = vpop.f32.mrf.mxu0
        %v717 = vadd.f32 %v618, %v716
        %718 = vmatprep.mubr.f32.mxu0 0.0
        %719 = vmatmul.mubr.f32.gmra.mxu0 %v640
        %v720 = vpop.f32.mrf.mxu0
        %v721 = vadd.f32 %v623, %v720
        %v722 = vpop.f32.mrf.mxu0
        %v723 = vadd.f32 %v623, %v722
        %724 = vmatprep.mubr.f32.mxu0 0.0
        %725 = vmatmul.mubr.f32.gmra.mxu0 %v643
        %v726 = vpop.f32.mrf.mxu0
        %v727 = vadd.f32 %v628, %v726
        %v728 = vpop.f32.mrf.mxu0
        %v729 = vadd.f32 %v628, %v728
        %730 = vmatprep.mubr.f32.mxu0 0.0
        %731 = vmatmul.mubr.f32.gmra.mxu0 %v646
        %v732 = vpop.f32.mrf.mxu0
        %v733 = vadd.f32 %v633, %v732
        %v734 = vpop.f32.mrf.mxu0
        %v735 = vadd.f32 %v633, %v734
        %736 = vdwg.mxu0
        %v737 = vmax.f32 %v715, 0.0
        %v738 = vmax.f32 %v717, 0.0
        %v739 = vmax.f32 %v721, 0.0
        %v740 = vmax.f32 %v723, 0.0
        %v741 = vmax.f32 %v727, 0.0
        %v742 = vmax.f32 %v729, 0.0
        %v743 = vmax.f32 %v733, 0.0
        %v744 = vmax.f32 %v735, 0.0
        %v745 = vld [vmem:[#allocation7] sm:$0xff]
        %v746 = vld [vmem:[#allocation7 + $0x8] sm:$0xff]
        %v747 = vld [vmem:[#allocation7 + $0x10] sm:$0xff]
        %v748 = vld [vmem:[#allocation7 + $0x18] sm:$0xff]
        %v749 = vld [vmem:[%s6] sm:$0xff]
        %v750 = vld [vmem:[%s6 + $0x8] sm:$0xff]
        %v751 = vld [vmem:[%s6 + $0x10] sm:$0xff]
        %v752 = vld [vmem:[%s6 + $0x18] sm:$0xff]
        %754 = vset.pattern.permute.xlu0 0
        %755 = vperm.xlu0 %754, %v749
        %v756 = vpop.permute.xlu0 %755
        %759 = vset.pattern.permute.xlu0 0
        %760 = vperm.xlu0 %759, %v750
        %v761 = vpop.permute.xlu0 %760
        %764 = vset.pattern.permute.xlu0 0
        %765 = vperm.xlu0 %764, %v751
        %v766 = vpop.permute.xlu0 %765
        %769 = vset.pattern.permute.xlu0 0
        %770 = vperm.xlu0 %769, %v752
        %v771 = vpop.permute.xlu0 %770
        %v774 = vsel %vm635, %v745, 0
        %v777 = vsel %vm635, %v746, 0
        %v780 = vsel %vm635, %v747, 0
        %v783 = vsel %vm635, %v748, 0
        %785 = vmatprep.subr.mxu0 0.0
        %786 = vmatpush1.msra.mxu0 0.0
        %787 = vmatprep.subr.mxu0 0.0
        %788 = vmatpush1.msra.mxu0 0.0
        %789 = vmatprep.subr.mxu0 0.0
        %790 = vmatpush1.msra.mxu0 0.0
        %791 = vmatprep.subr.mxu0 0.0
        %792 = vmatpush1.msra.mxu0 0.0
        %793 = vmatprep.subr.mxu0 0.0
        %794 = vmatpush1.msra.mxu0 0.0
        %795 = vmatprep.subr.mxu0 0.0
        %796 = vmatpush1.msra.mxu0 0.0
        %797 = vmatprep.subr.mxu0 0.0
        %798 = vmatpush1.msra.mxu0 0.0
        %799 = vmatprep.subr.mxu0 0.0
        %800 = vmatpush1.msra.mxu0 0.0
        %801 = vmatprep.subr.mxu0 0.0
        %802 = vmatpush1.msra.mxu0 0.0
        %803 = vmatprep.subr.mxu0 0.0
        %804 = vmatpush1.msra.mxu0 0.0
        %805 = vmatprep.subr.mxu0 0.0
        %806 = vmatpush1.msra.mxu0 0.0
        %807 = vmatprep.subr.mxu0 0.0
        %808 = vmatpush1.msra.mxu0 0.0
        %809 = vmatprep.subr.mxu0 %v744
        %810 = vmatpush1.msra.mxu0 %v743
        %811 = vmatprep.subr.mxu0 %v742
        %812 = vmatpush1.msra.mxu0 %v741
        %813 = vmatprep.subr.mxu0 %v740
        %814 = vmatpush1.msra.mxu0 %v739
        %815 = vmatprep.subr.mxu0 %v738
        %816 = vmatpush1.msra.mxu0 %v737
        %817 = vmatprep.subr.mxu0 0.0
        %818 = vmatpush2.msra.mxu0 0.0
        %819 = vmatprep.subr.mxu0 0.0
        %820 = vmatpush2.msra.mxu0 0.0
        %821 = vmatprep.subr.mxu0 0.0
        %822 = vmatpush2.msra.mxu0 0.0
        %823 = vmatprep.subr.mxu0 0.0
        %824 = vmatpush2.msra.mxu0 0.0
        %825 = vmatprep.subr.mxu0 0.0
        %826 = vmatpush2.msra.mxu0 0.0
        %827 = vmatprep.subr.mxu0 0.0
        %828 = vmatpush2.msra.mxu0 0.0
        %829 = vmatprep.subr.mxu0 0.0
        %830 = vmatpush2.msra.mxu0 0.0
        %831 = vmatprep.subr.mxu0 0.0
        %832 = vmatpush2.msra.mxu0 0.0
        %833 = vmatprep.subr.mxu0 0.0
        %834 = vmatpush2.msra.mxu0 0.0
        %835 = vmatprep.subr.mxu0 0.0
        %836 = vmatpush2.msra.mxu0 0.0
        %837 = vmatprep.subr.mxu0 0.0
        %838 = vmatpush2.msra.mxu0 0.0
        %839 = vmatprep.subr.mxu0 0.0
        %840 = vmatpush2.msra.mxu0 0.0
        %841 = vmatprep.subr.mxu0 0.0
        %842 = vmatpush2.msra.mxu0 0.0
        %843 = vmatprep.subr.mxu0 0.0
        %844 = vmatpush2.msra.mxu0 0.0
        %845 = vmatprep.subr.mxu0 0.0
        %846 = vmatpush2.msra.mxu0 0.0
        %847 = vmatprep.subr.mxu0 0.0
        %848 = vmatpush2.msra.mxu0 0.0
        %849 = vmatprep.mubr.f32.mxu0 0.0
        %850 = vmatmul.mubr.f32.gmra.mxu0 %v774
        %v851 = vpop.f32.mrf.mxu0
        %v852 = vadd.f32 %v756, %v851
        %v853 = vpop.f32.mrf.mxu0
        %v854 = vadd.f32 %v756, %v853
        %855 = vmatprep.mubr.f32.mxu0 0.0
        %856 = vmatmul.mubr.f32.gmra.mxu0 %v777
        %v857 = vpop.f32.mrf.mxu0
        %v858 = vadd.f32 %v761, %v857
        %v859 = vpop.f32.mrf.mxu0
        %v860 = vadd.f32 %v761, %v859
        %861 = vmatprep.mubr.f32.mxu0 0.0
        %862 = vmatmul.mubr.f32.gmra.mxu0 %v780
        %v863 = vpop.f32.mrf.mxu0
        %v864 = vadd.f32 %v766, %v863
        %v865 = vpop.f32.mrf.mxu0
        %v866 = vadd.f32 %v766, %v865
        %867 = vmatprep.mubr.f32.mxu0 0.0
        %868 = vmatmul.mubr.f32.gmra.mxu0 %v783
        %v869 = vpop.f32.mrf.mxu0
        %v870 = vadd.f32 %v771, %v869
        %v871 = vpop.f32.mrf.mxu0
        %v872 = vadd.f32 %v771, %v871
        %873 = vdwg.mxu0
        %v874 = vmul.f32 %v864, 1.442695
        %v875 = vpow.pop %v874
        %v876 = vmul.f32 %v866, 1.442695
        %v877 = vpow.pop %v876
        %v878 = vmul.f32 %v870, 1.442695
        %v879 = vpow.pop %v878
        %v880 = vmul.f32 %v872, 1.442695
        %v881 = vpow.pop %v880
        %v882 = vld [vmem:[%s444] sm:$0xff]
        %v883 = vld [vmem:[%s444 + $0x8] sm:$0xff]
        %v884 = vld [vmem:[%s444 + $0x10] sm:$0xff]
        %v885 = vld [vmem:[%s444 + $0x18] sm:$0xff]
        %v886 = vmul.f32 %v875, %v882
        %v887 = vmul.f32 %v877, %v883
        %v888 = vmul.f32 %v879, %v884
        %v889 = vmul.f32 %v881, %v885
        %v890 = vadd.f32 %v852, %v886
        %v891 = vadd.f32 %v854, %v887
        %v892 = vadd.f32 %v858, %v888
        %v893 = vadd.f32 %v860, %v889
        %894 = vst [vmem:[%s426] sm:$0xff] %v890
        %895 = vst [vmem:[%s426 + $0x8] sm:$0xff] %v891
        %896 = vst [vmem:[%s426 + $0x10] sm:$0xff] %v892
        %897 = vst [vmem:[%s426 + $0x18] sm:$0xff] %v893
        %v898 = vmul.f32 %v875, %v875
        %v899 = vmul.f32 %v877, %v877
        %v900 = vmul.f32 %v879, %v879
        %v901 = vmul.f32 %v881, %v881
        %v902 = vmul.f32 %v852, %v852
        %v903 = vmul.f32 %v854, %v854
        %v904 = vmul.f32 %v858, %v858
        %v905 = vmul.f32 %v860, %v860
        %v906 = vadd.f32 %v898, %v902
        %v907 = vadd.f32 %v899, %v903
        %v908 = vadd.f32 %v900, %v904
        %v909 = vadd.f32 %v901, %v905
        %v910 = vsub.f32 %v906, %v864
        %v911 = vsub.f32 %v907, %v866
        %v912 = vsub.f32 %v908, %v870
        %v913 = vsub.f32 %v909, %v872
        %v914 = vsub.f32 %v910, 0.5
        %v915 = vsub.f32 %v911, 0.5
        %v916 = vsub.f32 %v912, 0.5
        %v917 = vsub.f32 %v913, 0.5
        %v918 = vadd.f32 %v914, %v915
        %919 = vadd.xlane.f32.xlu0 %v918
        %v920 = vpop.xlane.xlu0 %919
        %v921 = vadd.f32 %v916, %v917
        %922 = vadd.xlane.f32.xlu0 %v921
        %v923 = vpop.xlane.xlu0 %922
        %v924 = vadd.f32 %v920, %v923
        %v925 = vrot.slane %v924, 4
        %v926 = vadd.f32 %v924, %v925
        %v927 = vrot.slane %v926, 2
        %v928 = vadd.f32 %v926, %v927
        %v929 = vrot.slane %v928, 1
        %v930 = vadd.f32 %v928, %v929
        %vm931 = vcmask 0
        %932 = vst.msk [vmem:[%s452] sm:$0x1] %vm931, %v930
        %s933 = sand.u32 %s232, 1
        %s934 = scalar_lea.sflag [#allocation4], %s933
        %s935 = sand.u32 %s232, 1
        %s936 = smul.addr %s935, 32
        %s937 = scalar_lea.vmem [#allocation8], %s936
        %p938 = scmp.lt.s32.totalorder %s32, 1
        %s939 = scalar_select %p938, %s32, 1
        %p940 = scmp.lt.s32.totalorder %s33, 0
        %s941 = scalar_select %p940, %s33, 0
        %s942 = sadd.s32 %s941, %s939
        %s943 = scalar_lea.vmem %s9, %s942
        // Predicated region
        $region65: #{tpu_custom_call.1} parent=51 // pred_check
          %p944 = pneg %p242
        $region66: #{tpu_custom_call.1} parent=51 // pred_check_branch
          %946 = sbr.rel (%p944) target = $region68
        $region67: #{tpu_custom_call.1} parent=51 // pred_region
          %s947 = smul.u32 2, %s33
          %s949 = ssub.s32 512, 512
          %950 = vsyncadd %s934, %s949
          %s951 = smul.addr %s32, 4
          %s952 = sadd.s32 %s947, %s951
          %s953 = smul.addr %s952, 128
          %s954 = scalar_lea.hbm %s8, %s953
          %s955 = sshll.u32 %s937, 4
          %s956 = int_to_ptr.vmem [resolvable:$true] %s955
          %961 = dma.vmem_to_hbm [thread:$0]  %s956, 512, %s954, %s934, 256, 256, 16
        $region68: #{tpu_custom_call.1} parent=51 // pred_fallthru
          _
        // Predicated region
        $region69: #{tpu_custom_call.1} parent=51 // pred_check
          %p962 = pneg %p270
        $region70: #{tpu_custom_call.1} parent=51 // pred_check_branch
          %964 = sbr.rel (%p962) target = $region72
        $region71: #{tpu_custom_call.1} parent=51 // pred_region
          _
        $region72: #{tpu_custom_call.1} parent=51 // pred_fallthru
          _
      $region52: #{tpu_custom_call.1} parent=5 // pred_fallthru
        _
      %p965 = scmp.le.s32.totalorder 2, %s23
      // Predicated region
      $region73: #{tpu_custom_call.1} parent=5 // pred_check
        %p966 = pneg %p965
      $region74: #{tpu_custom_call.1} parent=5 // pred_check_branch
        %968 = sbr.rel (%p966) target = $region76
      $region75: #{tpu_custom_call.1} parent=5 // pred_region
        %s969 = ssub.s32 %s23, 2
        // Predicated region
        $region77: #{tpu_custom_call.1} parent=75 // pred_check
          %p970 = pneg %p248
        $region78: #{tpu_custom_call.1} parent=75 // pred_check_branch
          %972 = sbr.rel (%p970) target = $region80
        $region79: #{tpu_custom_call.1} parent=75 // pred_region
          %s973 = sand.u32 %s233, 1
          %s974 = scalar_lea.sflag [#allocation4], %s973
          %s975 = sand.u32 %s233, 1
          %s976 = smul.addr %s975, 32
          %s977 = scalar_lea.vmem [#allocation8], %s976
          %978 = dma.done %s974, 512
        $region80: #{tpu_custom_call.1} parent=75 // pred_fallthru
          _
        // Predicated region
        $region81: #{tpu_custom_call.1} parent=75 // pred_check
          %p979 = pneg %p276
        $region82: #{tpu_custom_call.1} parent=75 // pred_check_branch
          %981 = sbr.rel (%p979) target = $region84
        $region83: #{tpu_custom_call.1} parent=75 // pred_region
          %p982 = scmp.lt.s32.totalorder %s34, 1
          %s983 = scalar_select %p982, %s34, 1
          %p984 = scmp.lt.s32.totalorder %s35, 0
          %s985 = scalar_select %p984, %s35, 0
          %s986 = sadd.s32 %s985, %s983
          %s987 = scalar_lea.vmem %s9, %s986
        $region84: #{tpu_custom_call.1} parent=75 // pred_fallthru
          _
      $region76: #{tpu_custom_call.1} parent=5 // pred_fallthru
        _
    $region6: #{tpu_custom_call.1} parent=1 // loop_footer
      %s27 = sadd.s32 1, %s23
    $region7: #{tpu_custom_call.1} parent=1 // loop_footer_branch
      %22 = sbr.rel target = $region3
    $region8: #{tpu_custom_call.1} parent=1 // loop_exit
      _
    %988 = vsyncpa [#allocation3], 1
    %s989 = scalar_lea.sflag [#allocation3], 1
    %990 = vsyncpa %s989, 1
    %991 = vsyncpa [#allocation6], 1
    %992 = vsyncpa [#allocation4], 1
    %s993 = scalar_lea.sflag [#allocation4], 1
    %994 = vsyncpa %s993, 1

// kernel: tpu_custom_call.1
$region0: #{tpu_custom_call.1}
  #allocation0 [shape = 'u32[]', space=smem, size = 0x4, offset = 0x4, fixed_abs, tag = 'smem constant byte address 0x4 - core index']
  #allocation1 [shape = 'u32[144,128]{1,0:T(1,128)}', space=vmem, size = 0x12000, scoped, tag = 'internal scratch']
  %s0 = inlined_call_operand.hbm [shape: f32[2,64,256], index: 0, kind: input, shape index: {}]
  %s1 = inlined_call_operand.vmem [shape: f32[32,64], index: 1, kind: input, shape index: {}]
  %s2 = inlined_call_operand.vmem [shape: f32[32,1], index: 2, kind: input, shape index: {}]
  %s3 = inlined_call_operand.hbm [shape: f32[32,32], index: 3, kind: input, shape index: {}]
  %s4 = inlined_call_operand.vmem [shape: f32[32,1], index: 4, kind: input, shape index: {}]
  %s5 = inlined_call_operand.hbm [shape: f32[32,32], index: 5, kind: input, shape index: {}]
  %s6 = inlined_call_operand.vmem [shape: f32[32,1], index: 6, kind: input, shape index: {}]
  %s7 = inlined_call_operand.vmem [shape: f32[2,16,256], index: 7, kind: input, shape index: {}]
  %s8 = inlined_call_operand.hbm [shape: f32[2,16,256], index: 8, kind: output, shape index: {0}]
  %s9 = inlined_call_operand.vmem [shape: f32[2,1,1,1], index: 9, kind: output, shape index: {1}]
  %10 = xla_tuple %s8, %s9
  %s11 = sld [smem:[#allocation0]]
  $region85: #{tpu_custom_call.1} parent=0
    _
  %s13 = ssub.s32 1, %s11
  %s14 = scalar_select 0, %s13, %s11
  $region1: #{tpu_custom_call.1} parent=0
    #allocation2 [shape = 'u8[131072]{0}', space=vmem, size = 0x20000, scoped, tag = 'input window, operand 0']
    #allocation3 [shape = 's32[2]{0}', space=sflag, size = 0x8, scoped, tag = 'scoped memory for tpu_custom_call.1']
    #allocation4 [shape = 's32[2]{0}', space=sflag, size = 0x8, scoped, tag = 'scoped memory for tpu_custom_call.1']
    #allocation5 [shape = 'u8[16384]{0}', space=vmem, size = 0x4000, scoped, tag = 'input window, operand 3, single buffered']
    #allocation6 [shape = 's32[1]{0}', space=sflag, size = 0x4, scoped, tag = 'scoped memory for tpu_custom_call.1']
    #allocation7 [shape = 'u8[16384]{0}', space=vmem, size = 0x4000, scoped, tag = 'input window, operand 5, single buffered']
    #allocation8 [shape = 'u8[32768]{0}', space=vmem, size = 0x8000, scoped, tag = 'output window, operand 0']
    %15 = vsyncpa [#allocation3], 0
    %s16 = scalar_lea.sflag [#allocation3], 1
    %17 = vsyncpa %s16, 0
    %18 = vsyncpa [#allocation6], 0
    %19 = vsyncpa [#allocation4], 0
    %s20 = scalar_lea.sflag [#allocation4], 1
    %21 = vsyncpa %s20, 0
    loop: start=0, step=1, limit=4
    $region2: #{tpu_custom_call.1} parent=1 // loop_pre_header
      _
    $region3: #{tpu_custom_call.1} parent=1 // loop_header
      %s23 = sphi 0, %s27
      %p24 = scmp.ge.s32.totalorder %s23, 4
      %s30 = sphi 0, %s42
      %s31 = sphi 0, %s38
      %s32 = sphi 0, %s30
      %s33 = sphi 0, %s31
      %s34 = sphi 0, %s32
      %s35 = sphi 0, %s33
      %s47 = sphi 0, %s49
      %s50 = sphi 0, %s47
      %s51 = sphi 0, %s50
      %s67 = sphi 0, %s51
      %s71 = sphi 0, %s71
      %s73 = sphi 0, %s71
      %s74 = sphi 0, %s73
      %s88 = sphi 0, %s74
      %s92 = sphi 0, %s92
      %s94 = sphi 0, %s92
      %s95 = sphi 0, %s94
      %s109 = sphi 0, %s95
      %s113 = sphi 0, %s113
      %s115 = sphi 0, %s113
      %s116 = sphi 0, %s115
      %s130 = sphi 0, %s116
      %s134 = sphi 0, %s134
      %s136 = sphi 0, %s134
      %s137 = sphi 0, %s136
      %s151 = sphi 0, %s137
      %s155 = sphi 0, %s155
      %s157 = sphi 0, %s155
      %s158 = sphi 0, %s157
      %s172 = sphi 0, %s158
      %s176 = sphi 0, %s176
      %s178 = sphi 0, %s176
      %s179 = sphi 0, %s178
      %s193 = sphi 0, %s179
      %s201 = sphi 0, %s203
      %s204 = sphi 0, %s201
      %s205 = sphi 0, %s204
      %s221 = sphi 0, %s205
      %s229 = sphi 0, %s231
      %s232 = sphi 0, %s229
      %s233 = sphi 0, %s232
      %s249 = sphi 0, %s233
      %s257 = sphi 0, %s259
      %s260 = sphi 0, %s257
      %s261 = sphi 0, %s260
      %s277 = sphi 0, %s261
    $region4: #{tpu_custom_call.1} parent=1 // loop_header_branch
      %26 = sbr.rel (%p24) target = $region8
    $region5: #{tpu_custom_call.1} parent=1 // loop_body
      %s28 = ssub.s32 %s23, 1
      %s29 = ssub.s32 %s23, 2
      %s36 = sadd.s32 1, %s31
      %p37 = scmp.ge.s32.totalorder %s36, 1
      %s38 = scalar_select %p37, 0, %s36
      %s39 = sadd.s32 1, %s30
      %s40 = scalar_select %p37, %s39, %s30
      %p41 = scmp.ge.s32.totalorder %s40, 2
      %s42 = scalar_select %p41, 0, %s40
      %s43 = ssub.s32 %s30, %s42
      %s44 = ssub.s32 %s31, %s38
      %s45 = sor.u32 %s43, %s44
      %p46 = scmp.eq.s32.totalorder %s45, 0
      %s48 = sadd.s32 %s47, 1
      %s49 = scalar_select %p46, %s47, %s48
      %p52 = pneg %p46
      %p53 = scmp.eq.s32.totalorder %s23, 1
      %p54 = por %p52, %p53
      %p55 = scmp.ne.s32.totalorder %s47, %s50
      %p56 = scmp.eq.s32.totalorder %s23, 0
      %p57 = por %p55, %p56
      %p58 = scmp.ne.s32.totalorder %s47, %s50
      %p59 = scmp.eq.s32.totalorder %s28, 1
      %p60 = por %p58, %p59
      %p61 = scmp.ne.s32.totalorder %s50, %s51
      %p62 = scmp.eq.s32.totalorder %s28, 0
      %p63 = por %p61, %p62
      %p64 = scmp.ne.s32.totalorder %s50, %s51
      %p65 = scmp.eq.s32.totalorder %s29, 1
      %p66 = por %p64, %p65
      %p68 = scmp.ne.s32.totalorder %s51, %s67
      %p69 = scmp.eq.s32.totalorder %s29, 0
      %p70 = por %p68, %p69
      %s72 = sadd.s32 %s71, 1
      %p75 = scmp.eq.s32.totalorder %s23, 1
      %p76 = scmp.ne.s32.totalorder %s71, %s73
      %p77 = scmp.eq.s32.totalorder %s23, 0
      %p78 = por %p76, %p77
      %p79 = scmp.ne.s32.totalorder %s71, %s73
      %p80 = scmp.eq.s32.totalorder %s28, 1
      %p81 = por %p79, %p80
      %p82 = scmp.ne.s32.totalorder %s73, %s74
      %p83 = scmp.eq.s32.totalorder %s28, 0
      %p84 = por %p82, %p83
      %p85 = scmp.ne.s32.totalorder %s73, %s74
      %p86 = scmp.eq.s32.totalorder %s29, 1
      %p87 = por %p85, %p86
      %p89 = scmp.ne.s32.totalorder %s74, %s88
      %p90 = scmp.eq.s32.totalorder %s29, 0
      %p91 = por %p89, %p90
      %s93 = sadd.s32 %s92, 1
      %p96 = scmp.eq.s32.totalorder %s23, 1
      %p97 = scmp.ne.s32.totalorder %s92, %s94
      %p98 = scmp.eq.s32.totalorder %s23, 0
      %p99 = por %p97, %p98
      %p100 = scmp.ne.s32.totalorder %s92, %s94
      %p101 = scmp.eq.s32.totalorder %s28, 1
      %p102 = por %p100, %p101
      %p103 = scmp.ne.s32.totalorder %s94, %s95
      %p104 = scmp.eq.s32.totalorder %s28, 0
      %p105 = por %p103, %p104
      %p106 = scmp.ne.s32.totalorder %s94, %s95
      %p107 = scmp.eq.s32.totalorder %s29, 1
      %p108 = por %p106, %p107
      %p110 = scmp.ne.s32.totalorder %s95, %s109
      %p111 = scmp.eq.s32.totalorder %s29, 0
      %p112 = por %p110, %p111
      %s114 = sadd.s32 %s113, 1
      %p117 = scmp.eq.s32.totalorder %s23, 1
      %p118 = scmp.ne.s32.totalorder %s113, %s115
      %p119 = scmp.eq.s32.totalorder %s23, 0
      %p120 = por %p118, %p119
      %p121 = scmp.ne.s32.totalorder %s113, %s115
      %p122 = scmp.eq.s32.totalorder %s28, 1
      %p123 = por %p121, %p122
      %p124 = scmp.ne.s32.totalorder %s115, %s116
      %p125 = scmp.eq.s32.totalorder %s28, 0
      %p126 = por %p124, %p125
      %p127 = scmp.ne.s32.totalorder %s115, %s116
      %p128 = scmp.eq.s32.totalorder %s29, 1
      %p129 = por %p127, %p128
      %p131 = scmp.ne.s32.totalorder %s116, %s130
      %p132 = scmp.eq.s32.totalorder %s29, 0
      %p133 = por %p131, %p132
      %s135 = sadd.s32 %s134, 1
      %p138 = scmp.eq.s32.totalorder %s23, 1
      %p139 = scmp.ne.s32.totalorder %s134, %s136
      %p140 = scmp.eq.s32.totalorder %s23, 0
      %p141 = por %p139, %p140
      %p142 = scmp.ne.s32.totalorder %s134, %s136
      %p143 = scmp.eq.s32.totalorder %s28, 1
      %p144 = por %p142, %p143
      %p145 = scmp.ne.s32.totalorder %s136, %s137
      %p146 = scmp.eq.s32.totalorder %s28, 0
      %p147 = por %p145, %p146
      %p148 = scmp.ne.s32.totalorder %s136, %s137
      %p149 = scmp.eq.s32.totalorder %s29, 1
      %p150 = por %p148, %p149
      %p152 = scmp.ne.s32.totalorder %s137, %s151
      %p153 = scmp.eq.s32.totalorder %s29, 0
      %p154 = por %p152, %p153
      %s156 = sadd.s32 %s155, 1
      %p159 = scmp.eq.s32.totalorder %s23, 1
      %p160 = scmp.ne.s32.totalorder %s155, %s157
      %p161 = scmp.eq.s32.totalorder %s23, 0
      %p162 = por %p160, %p161
      %p163 = scmp.ne.s32.totalorder %s155, %s157
      %p164 = scmp.eq.s32.totalorder %s28, 1
      %p165 = por %p163, %p164
      %p166 = scmp.ne.s32.totalorder %s157, %s158
      %p167 = scmp.eq.s32.totalorder %s28, 0
      %p168 = por %p166, %p167
      %p169 = scmp.ne.s32.totalorder %s157, %s158
      %p170 = scmp.eq.s32.totalorder %s29, 1
      %p171 = por %p169, %p170
      %p173 = scmp.ne.s32.totalorder %s158, %s172
      %p174 = scmp.eq.s32.totalorder %s29, 0
      %p175 = por %p173, %p174
      %s177 = sadd.s32 %s176, 1
      %p180 = scmp.eq.s32.totalorder %s23, 1
      %p181 = scmp.ne.s32.totalorder %s176, %s178
      %p182 = scmp.eq.s32.totalorder %s23, 0
      %p183 = por %p181, %p182
      %p184 = scmp.ne.s32.totalorder %s176, %s178
      %p185 = scmp.eq.s32.totalorder %s28, 1
      %p186 = por %p184, %p185
      %p187 = scmp.ne.s32.totalorder %s178, %s179
      %p188 = scmp.eq.s32.totalorder %s28, 0
      %p189 = por %p187, %p188
      %p190 = scmp.ne.s32.totalorder %s178, %s179
      %p191 = scmp.eq.s32.totalorder %s29, 1
      %p192 = por %p190, %p191
      %p194 = scmp.ne.s32.totalorder %s179, %s193
      %p195 = scmp.eq.s32.totalorder %s29, 0
      %p196 = por %p194, %p195
      %s197 = ssub.s32 %s30, %s42
      %s198 = ssub.s32 %s31, %s38
      %s199 = sor.u32 %s197, %s198
      %p200 = scmp.eq.s32.totalorder %s199, 0
      %s202 = sadd.s32 %s201, 1
      %s203 = scalar_select %p200, %s201, %s202
      %p206 = pneg %p200
      %p207 = scmp.eq.s32.totalorder %s23, 1
      %p208 = por %p206, %p207
      %p209 = scmp.ne.s32.totalorder %s201, %s204
      %p210 = scmp.eq.s32.totalorder %s23, 0
      %p211 = por %p209, %p210
      %p212 = scmp.ne.s32.totalorder %s201, %s204
      %p213 = scmp.eq.s32.totalorder %s28, 1
      %p214 = por %p212, %p213
      %p215 = scmp.ne.s32.totalorder %s204, %s205
      %p216 = scmp.eq.s32.totalorder %s28, 0
      %p217 = por %p215, %p216
      %p218 = scmp.ne.s32.totalorder %s204, %s205
      %p219 = scmp.eq.s32.totalorder %s29, 1
      %p220 = por %p218, %p219
      %p222 = scmp.ne.s32.totalorder %s205, %s221
      %p223 = scmp.eq.s32.totalorder %s29, 0
      %p224 = por %p222, %p223
      %s225 = ssub.s32 %s30, %s42
      %s226 = ssub.s32 %s31, %s38
      %s227 = sor.u32 %s225, %s226
      %p228 = scmp.eq.s32.totalorder %s227, 0
      %s230 = sadd.s32 %s229, 1
      %s231 = scalar_select %p228, %s229, %s230
      %p234 = pneg %p228
      %p235 = scmp.eq.s32.totalorder %s23, 1
      %p236 = por %p234, %p235
      %p237 = scmp.ne.s32.totalorder %s229, %s232
      %p238 = scmp.eq.s32.totalorder %s23, 0
      %p239 = por %p237, %p238
      %p240 = scmp.ne.s32.totalorder %s229, %s232
      %p241 = scmp.eq.s32.totalorder %s28, 1
      %p242 = por %p240, %p241
      %p243 = scmp.ne.s32.totalorder %s232, %s233
      %p244 = scmp.eq.s32.totalorder %s28, 0
      %p245 = por %p243, %p244
      %p246 = scmp.ne.s32.totalorder %s232, %s233
      %p247 = scmp.eq.s32.totalorder %s29, 1
      %p248 = por %p246, %p247
      %p250 = scmp.ne.s32.totalorder %s233, %s249
      %p251 = scmp.eq.s32.totalorder %s29, 0
      %p252 = por %p250, %p251
      %s253 = ssub.s32 %s30, %s42
      %s254 = ssub.s32 %s31, %s38
      %s255 = sor.u32 %s253, %s254
      %p256 = scmp.eq.s32.totalorder %s255, 0
      %s258 = sadd.s32 %s257, 1
      %s259 = scalar_select %p256, %s257, %s258
      %p262 = pneg %p256
      %p263 = scmp.eq.s32.totalorder %s23, 1
      %p264 = por %p262, %p263
      %p265 = scmp.ne.s32.totalorder %s257, %s260
      %p266 = scmp.eq.s32.totalorder %s23, 0
      %p267 = por %p265, %p266
      %p268 = scmp.ne.s32.totalorder %s257, %s260
      %p269 = scmp.eq.s32.totalorder %s28, 1
      %p270 = por %p268, %p269
      %p271 = scmp.ne.s32.totalorder %s260, %s261
      %p272 = scmp.eq.s32.totalorder %s28, 0
      %p273 = por %p271, %p272
      %p274 = scmp.ne.s32.totalorder %s260, %s261
      %p275 = scmp.eq.s32.totalorder %s29, 1
      %p276 = por %p274, %p275
      %p278 = scmp.ne.s32.totalorder %s261, %s277
      %p279 = scmp.eq.s32.totalorder %s29, 0
      %p280 = por %p278, %p279
      %p281 = scmp.le.s32.totalorder 1, %s23
      %p282 = scmp.lt.s32.totalorder %s23, 3
      %p283 = pnand %p281, %p282
      %p284 = pneg %p283
      // Predicated region
      $region9: #{tpu_custom_call.1} parent=5 // pred_check
        _
      $region10: #{tpu_custom_call.1} parent=5 // pred_check_branch
        %286 = sbr.rel (%p283) target = $region12
      $region11: #{tpu_custom_call.1} parent=5 // pred_region
        %s287 = ssub.s32 %s23, 1
        // Predicated region
        $region13: #{tpu_custom_call.1} parent=11 // pred_check
          %p288 = pneg %p84
        $region14: #{tpu_custom_call.1} parent=11 // pred_check_branch
          %290 = sbr.rel (%p288) target = $region16
        $region15: #{tpu_custom_call.1} parent=11 // pred_region
          _
        $region16: #{tpu_custom_call.1} parent=11 // pred_fallthru
          _
        // Predicated region
        $region17: #{tpu_custom_call.1} parent=11 // pred_check
          %p291 = pneg %p105
        $region18: #{tpu_custom_call.1} parent=11 // pred_check_branch
          %293 = sbr.rel (%p291) target = $region20
        $region19: #{tpu_custom_call.1} parent=11 // pred_region
          _
        $region20: #{tpu_custom_call.1} parent=11 // pred_fallthru
          _
        // Predicated region
        $region21: #{tpu_custom_call.1} parent=11 // pred_check
          %p294 = pneg %p126
        $region22: #{tpu_custom_call.1} parent=11 // pred_check_branch
          %296 = sbr.rel (%p294) target = $region24
        $region23: #{tpu_custom_call.1} parent=11 // pred_region
          %s298 = ssub.s32 512, 512
          %299 = vsyncadd [#allocation6], %s298
          %s300 = sshll.u32 [#allocation5], 4
          %s301 = int_to_ptr.vmem [resolvable:$true] %s300
          %306 = dma.hbm_to_vmem [thread:$0]  %s3, 512, %s301, [#allocation6], 128, 128, 8
        $region24: #{tpu_custom_call.1} parent=11 // pred_fallthru
          _
        // Predicated region
        $region25: #{tpu_custom_call.1} parent=11 // pred_check
          %p307 = pneg %p147
        $region26: #{tpu_custom_call.1} parent=11 // pred_check_branch
          %309 = sbr.rel (%p307) target = $region28
        $region27: #{tpu_custom_call.1} parent=11 // pred_region
          _
        $region28: #{tpu_custom_call.1} parent=11 // pred_fallthru
          _
        // Predicated region
        $region29: #{tpu_custom_call.1} parent=11 // pred_check
          %p310 = pneg %p168
        $region30: #{tpu_custom_call.1} parent=11 // pred_check_branch
          %312 = sbr.rel (%p310) target = $region32
        $region31: #{tpu_custom_call.1} parent=11 // pred_region
          %s314 = ssub.s32 512, 512
          %315 = vsyncadd [#allocation6], %s314
          %s316 = sshll.u32 [#allocation7], 4
          %s317 = int_to_ptr.vmem [resolvable:$true] %s316
          %322 = dma.hbm_to_vmem [thread:$0]  %s5, 512, %s317, [#allocation6], 128, 128, 8
        $region32: #{tpu_custom_call.1} parent=11 // pred_fallthru
          _
        // Predicated region
        $region33: #{tpu_custom_call.1} parent=11 // pred_check
          %p323 = pneg %p189
        $region34: #{tpu_custom_call.1} parent=11 // pred_check_branch
          %325 = sbr.rel (%p323) target = $region36
        $region35: #{tpu_custom_call.1} parent=11 // pred_region
          _
        $region36: #{tpu_custom_call.1} parent=11 // pred_fallthru
          _
      $region12: #{tpu_custom_call.1} parent=5 // pred_fallthru
        _
      %p326 = scmp.lt.s32.totalorder %s23, 2
      // Predicated region
      $region37: #{tpu_custom_call.1} parent=5 // pred_check
        %p327 = pneg %p326
      $region38: #{tpu_custom_call.1} parent=5 // pred_check_branch
        %329 = sbr.rel (%p327) target = $region40
      $region39: #{tpu_custom_call.1} parent=5 // pred_region
        // Predicated region
        $region41: #{tpu_custom_call.1} parent=39 // pred_check
          %p330 = pneg %p57
        $region42: #{tpu_custom_call.1} parent=39 // pred_check_branch
          %332 = sbr.rel (%p330) target = $region44
        $region43: #{tpu_custom_call.1} parent=39 // pred_region
          %s333 = sand.u32 %s47, 1
          %s334 = scalar_lea.sflag [#allocation3], %s333
          %s335 = sand.u32 %s47, 1
          %s336 = smul.addr %s335, 128
          %s337 = scalar_lea.vmem [#allocation2], %s336
          %s338 = smul.u32 2, %s31
          %s340 = ssub.s32 2048, 2048
          %341 = vsyncadd %s334, %s340
          %s342 = smul.addr %s30, 16
          %s343 = sadd.s32 %s338, %s342
          %s344 = smul.addr %s343, 128
          %s345 = scalar_lea.hbm %s0, %s344
          %s346 = sshll.u32 %s337, 4
          %s347 = int_to_ptr.vmem [resolvable:$true] %s346
          %352 = dma.hbm_to_vmem [thread:$0]  %s345, 2048, %s347, %s334, 256, 256, 16
        $region44: #{tpu_custom_call.1} parent=39 // pred_fallthru
          _
        // Predicated region
        $region45: #{tpu_custom_call.1} parent=39 // pred_check
          %p353 = pneg %p211
        $region46: #{tpu_custom_call.1} parent=39 // pred_check_branch
          %355 = sbr.rel (%p353) target = $region48
        $region47: #{tpu_custom_call.1} parent=39 // pred_region
          %s356 = smul.u32 2, %s31
          %p357 = scmp.lt.s32.totalorder %s30, 1
          %s358 = scalar_select %p357, %s30, 1
          %p359 = scmp.lt.s32.totalorder %s356, 1
          %s360 = scalar_select %p359, %s356, 1
          %s361 = smul.addr %s358, 4
          %s362 = sadd.s32 %s360, %s361
          %s363 = smul.addr %s362, 8
          %s364 = scalar_lea.vmem %s7, %s363
          %s365 = smul.u32 2, %s31
        $region48: #{tpu_custom_call.1} parent=39 // pred_fallthru
          _
      $region40: #{tpu_custom_call.1} parent=5 // pred_fallthru
        _
      %p366 = scmp.le.s32.totalorder 1, %s23
      %p367 = scmp.lt.s32.totalorder %s23, 3
      %p368 = pnand %p366, %p367
      %p369 = pneg %p368
      // Predicated region
      $region49: #{tpu_custom_call.1} parent=5 // pred_check
        _
      $region50: #{tpu_custom_call.1} parent=5 // pred_check_branch
        %371 = sbr.rel (%p368) target = $region52
      $region51: #{tpu_custom_call.1} parent=5 // pred_region
        %s372 = ssub.s32 %s23, 1
        %s373 = sand.u32 %s50, 1
        %s374 = scalar_lea.sflag [#allocation3], %s373
        %s375 = sand.u32 %s50, 1
        %s376 = smul.addr %s375, 128
        %s377 = scalar_lea.vmem [#allocation2], %s376
        // Predicated region
        $region53: #{tpu_custom_call.1} parent=51 // pred_check
          %p378 = pneg %p63
        $region54: #{tpu_custom_call.1} parent=51 // pred_check_branch
          %380 = sbr.rel (%p378) target = $region56
        $region55: #{tpu_custom_call.1} parent=51 // pred_region
          %381 = dma.done %s374, 2048
        $region56: #{tpu_custom_call.1} parent=51 // pred_fallthru
          _
        // Predicated region
        $region57: #{tpu_custom_call.1} parent=51 // pred_check
          %p382 = pneg %p126
        $region58: #{tpu_custom_call.1} parent=51 // pred_check_branch
          %384 = sbr.rel (%p382) target = $region60
        $region59: #{tpu_custom_call.1} parent=51 // pred_region
          %385 = dma.done [#allocation6], 512
        $region60: #{tpu_custom_call.1} parent=51 // pred_fallthru
          _
        // Predicated region
        $region61: #{tpu_custom_call.1} parent=51 // pred_check
          %p386 = pneg %p168
        $region62: #{tpu_custom_call.1} parent=51 // pred_check_branch
          %388 = sbr.rel (%p386) target = $region64
        $region63: #{tpu_custom_call.1} parent=51 // pred_region
          %389 = dma.done [#allocation6], 512
        $region64: #{tpu_custom_call.1} parent=51 // pred_fallthru
          _
        %s390 = sand.u32 %s50, 1
        %s391 = scalar_lea.sflag [#allocation3], %s390
        %s392 = sand.u32 %s50, 1
        %s393 = smul.addr %s392, 128
        %s394 = scalar_lea.vmem [#allocation2], %s393
        %p395 = pneg %p63
        %p396 = pneg %p60
        %p397 = pneg %p84
        %p398 = pneg %p81
        %p399 = pneg %p105
        %p400 = pneg %p102
        %p401 = pneg %p126
        %p402 = pneg %p123
        %p403 = pneg %p147
        %p404 = pneg %p144
        %p405 = pneg %p168
        %p406 = pneg %p165
        %p407 = pneg %p189
        %p408 = pneg %p186
        %s409 = smul.u32 2, %s33
        %p410 = scmp.lt.s32.totalorder %s32, 1
        %s411 = scalar_select %p410, %s32, 1
        %p412 = scmp.lt.s32.totalorder %s409, 1
        %s413 = scalar_select %p412, %s409, 1
        %s414 = smul.addr %s411, 4
        %s415 = sadd.s32 %s413, %s414
        %s416 = smul.addr %s415, 8
        %s417 = scalar_lea.vmem %s7, %s416
        %p418 = pneg %p217
        %p419 = pneg %p214
        %p420 = pneg %p245
        %p421 = pneg %p242
        %s422 = sand.u32 %s232, 1
        %s423 = scalar_lea.sflag [#allocation4], %s422
        %s424 = sand.u32 %s232, 1
        %s425 = smul.addr %s424, 32
        %s426 = scalar_lea.vmem [#allocation8], %s425
        %p427 = pneg %p273
        %p428 = pneg %p270
        %p429 = scmp.lt.s32.totalorder %s32, 1
        %s430 = scalar_select %p429, %s32, 1
        %p431 = scmp.lt.s32.totalorder %s33, 0
        %s432 = scalar_select %p431, %s33, 0
        %s433 = sadd.s32 %s432, %s430
        %s434 = scalar_lea.vmem %s9, %s433
        %s435 = smul.u32 2, %s33
        %s436 = smul.u32 2, %s33
        %p437 = scmp.lt.s32.totalorder %s32, 1
        %s438 = scalar_select %p437, %s32, 1
        %p439 = scmp.lt.s32.totalorder %s436, 1
        %s440 = scalar_select %p439, %s436, 1
        %s441 = smul.addr %s438, 4
        %s442 = sadd.s32 %s440, %s441
        %s443 = smul.addr %s442, 8
        %s444 = scalar_lea.vmem %s7, %s443
        %s445 = smul.u32 2, %s33
        %s446 = smul.u32 2, %s33
        %p447 = scmp.lt.s32.totalorder %s32, 1
        %s448 = scalar_select %p447, %s32, 1
        %p449 = scmp.lt.s32.totalorder %s33, 0
        %s450 = scalar_select %p449, %s33, 0
        %s451 = sadd.s32 %s450, %s448
        %s452 = scalar_lea.vmem %s9, %s451
        %v453 = vld [vmem:[%s377] sm:$0xff]
        %v454 = vld [vmem:[%s377 + $0x8] sm:$0xff]
        %v455 = vld [vmem:[%s377 + $0x10] sm:$0xff]
        %v456 = vld [vmem:[%s377 + $0x18] sm:$0xff]
        %v457 = vld [vmem:[%s377 + $0x20] sm:$0xff]
        %v458 = vld [vmem:[%s377 + $0x28] sm:$0xff]
        %v459 = vld [vmem:[%s377 + $0x30] sm:$0xff]
        %v460 = vld [vmem:[%s377 + $0x38] sm:$0xff]
        %v461 = vld [vmem:[%s377 + $0x40] sm:$0xff]
        %v462 = vld [vmem:[%s377 + $0x48] sm:$0xff]
        %v463 = vld [vmem:[%s377 + $0x50] sm:$0xff]
        %v464 = vld [vmem:[%s377 + $0x58] sm:$0xff]
        %v465 = vld [vmem:[%s377 + $0x60] sm:$0xff]
        %v466 = vld [vmem:[%s377 + $0x68] sm:$0xff]
        %v467 = vld [vmem:[%s377 + $0x70] sm:$0xff]
        %v468 = vld [vmem:[%s377 + $0x78] sm:$0xff]
        %v469 = vld [vmem:[%s1] sm:$0xff]
        %v470 = vld [vmem:[%s1 + $0x8] sm:$0xff]
        %v471 = vld [vmem:[%s1 + $0x10] sm:$0xff]
        %v472 = vld [vmem:[%s1 + $0x18] sm:$0xff]
        %v473 = vld [vmem:[%s2] sm:$0xff]
        %v474 = vld [vmem:[%s2 + $0x8] sm:$0xff]
        %v475 = vld [vmem:[%s2 + $0x10] sm:$0xff]
        %v476 = vld [vmem:[%s2 + $0x18] sm:$0xff]
        %478 = vset.pattern.permute.xlu0 0
        %479 = vperm.xlu0 %478, %v473
        %v480 = vpop.permute.xlu0 %479
        %483 = vset.pattern.permute.xlu0 0
        %484 = vperm.xlu0 %483, %v474
        %v485 = vpop.permute.xlu0 %484
        %488 = vset.pattern.permute.xlu0 0
        %489 = vperm.xlu0 %488, %v475
        %v490 = vpop.permute.xlu0 %489
        %493 = vset.pattern.permute.xlu0 0
        %494 = vperm.xlu0 %493, %v476
        %v495 = vpop.permute.xlu0 %494
        %vm497 = vcmask 523264
        %v499 = vsel %vm497, %v469, 0
        %v502 = vsel %vm497, %v470, 0
        %v505 = vsel %vm497, %v471, 0
        %v508 = vsel %vm497, %v472, 0
        %510 = vmatprep.subr.mxu0 0.0
        %511 = vmatpush1.msra.mxu0 0.0
        %512 = vmatprep.subr.mxu0 0.0
        %513 = vmatpush1.msra.mxu0 0.0
        %514 = vmatprep.subr.mxu0 0.0
        %515 = vmatpush1.msra.mxu0 0.0
        %516 = vmatprep.subr.mxu0 0.0
        %517 = vmatpush1.msra.mxu0 0.0
        %518 = vmatprep.subr.mxu0 0.0
        %519 = vmatpush1.msra.mxu0 0.0
        %520 = vmatprep.subr.mxu0 0.0
        %521 = vmatpush1.msra.mxu0 0.0
        %522 = vmatprep.subr.mxu0 0.0
        %523 = vmatpush1.msra.mxu0 0.0
        %524 = vmatprep.subr.mxu0 0.0
        %525 = vmatpush1.msra.mxu0 0.0
        %526 = vmatprep.subr.mxu0 %v468
        %527 = vmatpush1.msra.mxu0 %v467
        %528 = vmatprep.subr.mxu0 %v466
        %529 = vmatpush1.msra.mxu0 %v465
        %530 = vmatprep.subr.mxu0 %v464
        %531 = vmatpush1.msra.mxu0 %v463
        %532 = vmatprep.subr.mxu0 %v462
        %533 = vmatpush1.msra.mxu0 %v461
        %534 = vmatprep.subr.mxu0 %v460
        %535 = vmatpush1.msra.mxu0 %v459
        %536 = vmatprep.subr.mxu0 %v458
        %537 = vmatpush1.msra.mxu0 %v457
        %538 = vmatprep.subr.mxu0 %v456
        %539 = vmatpush1.msra.mxu0 %v455
        %540 = vmatprep.subr.mxu0 %v454
        %541 = vmatpush1.msra.mxu0 %v453
        %542 = vmatprep.subr.mxu0 0.0
        %543 = vmatpush2.msra.mxu0 0.0
        %544 = vmatprep.subr.mxu0 0.0
        %545 = vmatpush2.msra.mxu0 0.0
        %546 = vmatprep.subr.mxu0 0.0
        %547 = vmatpush2.msra.mxu0 0.0
        %548 = vmatprep.subr.mxu0 0.0
        %549 = vmatpush2.msra.mxu0 0.0
        %550 = vmatprep.subr.mxu0 0.0
        %551 = vmatpush2.msra.mxu0 0.0
        %552 = vmatprep.subr.mxu0 0.0
        %553 = vmatpush2.msra.mxu0 0.0
        %554 = vmatprep.subr.mxu0 0.0
        %555 = vmatpush2.msra.mxu0 0.0
        %556 = vmatprep.subr.mxu0 0.0
        %557 = vmatpush2.msra.mxu0 0.0
        %558 = vmatprep.subr.mxu0 0.0
        %559 = vmatpush2.msra.mxu0 0.0
        %560 = vmatprep.subr.mxu0 0.0
        %561 = vmatpush2.msra.mxu0 0.0
        %562 = vmatprep.subr.mxu0 0.0
        %563 = vmatpush2.msra.mxu0 0.0
        %564 = vmatprep.subr.mxu0 0.0
        %565 = vmatpush2.msra.mxu0 0.0
        %566 = vmatprep.subr.mxu0 0.0
        %567 = vmatpush2.msra.mxu0 0.0
        %568 = vmatprep.subr.mxu0 0.0
        %569 = vmatpush2.msra.mxu0 0.0
        %570 = vmatprep.subr.mxu0 0.0
        %571 = vmatpush2.msra.mxu0 0.0
        %572 = vmatprep.subr.mxu0 0.0
        %573 = vmatpush2.msra.mxu0 0.0
        %574 = vmatprep.mubr.f32.mxu0 0.0
        %575 = vmatmul.mubr.f32.gmra.mxu0 %v499
        %v576 = vpop.f32.mrf.mxu0
        %v577 = vadd.f32 %v480, %v576
        %v578 = vpop.f32.mrf.mxu0
        %v579 = vadd.f32 %v480, %v578
        %580 = vmatprep.mubr.f32.mxu0 0.0
        %581 = vmatmul.mubr.f32.gmra.mxu0 %v502
        %v582 = vpop.f32.mrf.mxu0
        %v583 = vadd.f32 %v485, %v582
        %v584 = vpop.f32.mrf.mxu0
        %v585 = vadd.f32 %v485, %v584
        %586 = vmatprep.mubr.f32.mxu0 0.0
        %587 = vmatmul.mubr.f32.gmra.mxu0 %v505
        %v588 = vpop.f32.mrf.mxu0
        %v589 = vadd.f32 %v490, %v588
        %v590 = vpop.f32.mrf.mxu0
        %v591 = vadd.f32 %v490, %v590
        %592 = vmatprep.mubr.f32.mxu0 0.0
        %593 = vmatmul.mubr.f32.gmra.mxu0 %v508
        %v594 = vpop.f32.mrf.mxu0
        %v595 = vadd.f32 %v495, %v594
        %v596 = vpop.f32.mrf.mxu0
        %v597 = vadd.f32 %v495, %v596
        %598 = vdwg.mxu0
        %v599 = vmax.f32 %v577, 0.0
        %v600 = vmax.f32 %v579, 0.0
        %v601 = vmax.f32 %v583, 0.0
        %v602 = vmax.f32 %v585, 0.0
        %v603 = vmax.f32 %v589, 0.0
        %v604 = vmax.f32 %v591, 0.0
        %v605 = vmax.f32 %v595, 0.0
        %v606 = vmax.f32 %v597, 0.0
        %v607 = vld [vmem:[#allocation5] sm:$0xff]
        %v608 = vld [vmem:[#allocation5 + $0x8] sm:$0xff]
        %v609 = vld [vmem:[#allocation5 + $0x10] sm:$0xff]
        %v610 = vld [vmem:[#allocation5 + $0x18] sm:$0xff]
        %v611 = vld [vmem:[%s4] sm:$0xff]
        %v612 = vld [vmem:[%s4 + $0x8] sm:$0xff]
        %v613 = vld [vmem:[%s4 + $0x10] sm:$0xff]
        %v614 = vld [vmem:[%s4 + $0x18] sm:$0xff]
        %616 = vset.pattern.permute.xlu0 0
        %617 = vperm.xlu0 %616, %v611
        %v618 = vpop.permute.xlu0 %617
        %621 = vset.pattern.permute.xlu0 0
        %622 = vperm.xlu0 %621, %v612
        %v623 = vpop.permute.xlu0 %622
        %626 = vset.pattern.permute.xlu0 0
        %627 = vperm.xlu0 %626, %v613
        %v628 = vpop.permute.xlu0 %627
        %631 = vset.pattern.permute.xlu0 0
        %632 = vperm.xlu0 %631, %v614
        %v633 = vpop.permute.xlu0 %632
        %vm635 = vcmask 261120
        %v637 = vsel %vm635, %v607, 0
        %v640 = vsel %vm635, %v608, 0
        %v643 = vsel %vm635, %v609, 0
        %v646 = vsel %vm635, %v610, 0
        %648 = vmatprep.subr.mxu0 0.0
        %649 = vmatpush1.msra.mxu0 0.0
        %650 = vmatprep.subr.mxu0 0.0
        %651 = vmatpush1.msra.mxu0 0.0
        %652 = vmatprep.subr.mxu0 0.0
        %653 = vmatpush1.msra.mxu0 0.0
        %654 = vmatprep.subr.mxu0 0.0
        %655 = vmatpush1.msra.mxu0 0.0
        %656 = vmatprep.subr.mxu0 0.0
        %657 = vmatpush1.msra.mxu0 0.0
        %658 = vmatprep.subr.mxu0 0.0
        %659 = vmatpush1.msra.mxu0 0.0
        %660 = vmatprep.subr.mxu0 0.0
        %661 = vmatpush1.msra.mxu0 0.0
        %662 = vmatprep.subr.mxu0 0.0
        %663 = vmatpush1.msra.mxu0 0.0
        %664 = vmatprep.subr.mxu0 0.0
        %665 = vmatpush1.msra.mxu0 0.0
        %666 = vmatprep.subr.mxu0 0.0
        %667 = vmatpush1.msra.mxu0 0.0
        %668 = vmatprep.subr.mxu0 0.0
        %669 = vmatpush1.msra.mxu0 0.0
        %670 = vmatprep.subr.mxu0 0.0
        %671 = vmatpush1.msra.mxu0 0.0
        %672 = vmatprep.subr.mxu0 %v606
        %673 = vmatpush1.msra.mxu0 %v605
        %674 = vmatprep.subr.mxu0 %v604
        %675 = vmatpush1.msra.mxu0 %v603
        %676 = vmatprep.subr.mxu0 %v602
        %677 = vmatpush1.msra.mxu0 %v601
        %678 = vmatprep.subr.mxu0 %v600
        %679 = vmatpush1.msra.mxu0 %v599
        %680 = vmatprep.subr.mxu0 0.0
        %681 = vmatpush2.msra.mxu0 0.0
        %682 = vmatprep.subr.mxu0 0.0
        %683 = vmatpush2.msra.mxu0 0.0
        %684 = vmatprep.subr.mxu0 0.0
        %685 = vmatpush2.msra.mxu0 0.0
        %686 = vmatprep.subr.mxu0 0.0
        %687 = vmatpush2.msra.mxu0 0.0
        %688 = vmatprep.subr.mxu0 0.0
        %689 = vmatpush2.msra.mxu0 0.0
        %690 = vmatprep.subr.mxu0 0.0
        %691 = vmatpush2.msra.mxu0 0.0
        %692 = vmatprep.subr.mxu0 0.0
        %693 = vmatpush2.msra.mxu0 0.0
        %694 = vmatprep.subr.mxu0 0.0
        %695 = vmatpush2.msra.mxu0 0.0
        %696 = vmatprep.subr.mxu0 0.0
        %697 = vmatpush2.msra.mxu0 0.0
        %698 = vmatprep.subr.mxu0 0.0
        %699 = vmatpush2.msra.mxu0 0.0
        %700 = vmatprep.subr.mxu0 0.0
        %701 = vmatpush2.msra.mxu0 0.0
        %702 = vmatprep.subr.mxu0 0.0
        %703 = vmatpush2.msra.mxu0 0.0
        %704 = vmatprep.subr.mxu0 0.0
        %705 = vmatpush2.msra.mxu0 0.0
        %706 = vmatprep.subr.mxu0 0.0
        %707 = vmatpush2.msra.mxu0 0.0
        %708 = vmatprep.subr.mxu0 0.0
        %709 = vmatpush2.msra.mxu0 0.0
        %710 = vmatprep.subr.mxu0 0.0
        %711 = vmatpush2.msra.mxu0 0.0
        %712 = vmatprep.mubr.f32.mxu0 0.0
        %713 = vmatmul.mubr.f32.gmra.mxu0 %v637
        %v714 = vpop.f32.mrf.mxu0
        %v715 = vadd.f32 %v618, %v714
        %v716 = vpop.f32.mrf.mxu0
        %v717 = vadd.f32 %v618, %v716
        %718 = vmatprep.mubr.f32.mxu0 0.0
        %719 = vmatmul.mubr.f32.gmra.mxu0 %v640
        %v720 = vpop.f32.mrf.mxu0
        %v721 = vadd.f32 %v623, %v720
        %v722 = vpop.f32.mrf.mxu0
        %v723 = vadd.f32 %v623, %v722
        %724 = vmatprep.mubr.f32.mxu0 0.0
        %725 = vmatmul.mubr.f32.gmra.mxu0 %v643
        %v726 = vpop.f32.mrf.mxu0
        %v727 = vadd.f32 %v628, %v726
        %v728 = vpop.f32.mrf.mxu0
        %v729 = vadd.f32 %v628, %v728
        %730 = vmatprep.mubr.f32.mxu0 0.0
        %731 = vmatmul.mubr.f32.gmra.mxu0 %v646
        %v732 = vpop.f32.mrf.mxu0
        %v733 = vadd.f32 %v633, %v732
        %v734 = vpop.f32.mrf.mxu0
        %v735 = vadd.f32 %v633, %v734
        %736 = vdwg.mxu0
        %v737 = vmax.f32 %v715, 0.0
        %v738 = vmax.f32 %v717, 0.0
        %v739 = vmax.f32 %v721, 0.0
        %v740 = vmax.f32 %v723, 0.0
        %v741 = vmax.f32 %v727, 0.0
        %v742 = vmax.f32 %v729, 0.0
        %v743 = vmax.f32 %v733, 0.0
        %v744 = vmax.f32 %v735, 0.0
        %v745 = vld [vmem:[#allocation7] sm:$0xff]
        %v746 = vld [vmem:[#allocation7 + $0x8] sm:$0xff]
        %v747 = vld [vmem:[#allocation7 + $0x10] sm:$0xff]
        %v748 = vld [vmem:[#allocation7 + $0x18] sm:$0xff]
        %v749 = vld [vmem:[%s6] sm:$0xff]
        %v750 = vld [vmem:[%s6 + $0x8] sm:$0xff]
        %v751 = vld [vmem:[%s6 + $0x10] sm:$0xff]
        %v752 = vld [vmem:[%s6 + $0x18] sm:$0xff]
        %754 = vset.pattern.permute.xlu0 0
        %755 = vperm.xlu0 %754, %v749
        %v756 = vpop.permute.xlu0 %755
        %759 = vset.pattern.permute.xlu0 0
        %760 = vperm.xlu0 %759, %v750
        %v761 = vpop.permute.xlu0 %760
        %764 = vset.pattern.permute.xlu0 0
        %765 = vperm.xlu0 %764, %v751
        %v766 = vpop.permute.xlu0 %765
        %769 = vset.pattern.permute.xlu0 0
        %770 = vperm.xlu0 %769, %v752
        %v771 = vpop.permute.xlu0 %770
        %v774 = vsel %vm635, %v745, 0
        %v777 = vsel %vm635, %v746, 0
        %v780 = vsel %vm635, %v747, 0
        %v783 = vsel %vm635, %v748, 0
        %785 = vmatprep.subr.mxu0 0.0
        %786 = vmatpush1.msra.mxu0 0.0
        %787 = vmatprep.subr.mxu0 0.0
        %788 = vmatpush1.msra.mxu0 0.0
        %789 = vmatprep.subr.mxu0 0.0
        %790 = vmatpush1.msra.mxu0 0.0
        %791 = vmatprep.subr.mxu0 0.0
        %792 = vmatpush1.msra.mxu0 0.0
        %793 = vmatprep.subr.mxu0 0.0
        %794 = vmatpush1.msra.mxu0 0.0
        %795 = vmatprep.subr.mxu0 0.0
        %796 = vmatpush1.msra.mxu0 0.0
        %797 = vmatprep.subr.mxu0 0.0
        %798 = vmatpush1.msra.mxu0 0.0
        %799 = vmatprep.subr.mxu0 0.0
        %800 = vmatpush1.msra.mxu0 0.0
        %801 = vmatprep.subr.mxu0 0.0
        %802 = vmatpush1.msra.mxu0 0.0
        %803 = vmatprep.subr.mxu0 0.0
        %804 = vmatpush1.msra.mxu0 0.0
        %805 = vmatprep.subr.mxu0 0.0
        %806 = vmatpush1.msra.mxu0 0.0
        %807 = vmatprep.subr.mxu0 0.0
        %808 = vmatpush1.msra.mxu0 0.0
        %809 = vmatprep.subr.mxu0 %v744
        %810 = vmatpush1.msra.mxu0 %v743
        %811 = vmatprep.subr.mxu0 %v742
        %812 = vmatpush1.msra.mxu0 %v741
        %813 = vmatprep.subr.mxu0 %v740
        %814 = vmatpush1.msra.mxu0 %v739
        %815 = vmatprep.subr.mxu0 %v738
        %816 = vmatpush1.msra.mxu0 %v737
        %817 = vmatprep.subr.mxu0 0.0
        %818 = vmatpush2.msra.mxu0 0.0
        %819 = vmatprep.subr.mxu0 0.0
        %820 = vmatpush2.msra.mxu0 0.0
        %821 = vmatprep.subr.mxu0 0.0
        %822 = vmatpush2.msra.mxu0 0.0
        %823 = vmatprep.subr.mxu0 0.0
        %824 = vmatpush2.msra.mxu0 0.0
        %825 = vmatprep.subr.mxu0 0.0
        %826 = vmatpush2.msra.mxu0 0.0
        %827 = vmatprep.subr.mxu0 0.0
        %828 = vmatpush2.msra.mxu0 0.0
        %829 = vmatprep.subr.mxu0 0.0
        %830 = vmatpush2.msra.mxu0 0.0
        %831 = vmatprep.subr.mxu0 0.0
        %832 = vmatpush2.msra.mxu0 0.0
        %833 = vmatprep.subr.mxu0 0.0
        %834 = vmatpush2.msra.mxu0 0.0
        %835 = vmatprep.subr.mxu0 0.0
        %836 = vmatpush2.msra.mxu0 0.0
        %837 = vmatprep.subr.mxu0 0.0
        %838 = vmatpush2.msra.mxu0 0.0
        %839 = vmatprep.subr.mxu0 0.0
        %840 = vmatpush2.msra.mxu0 0.0
        %841 = vmatprep.subr.mxu0 0.0
        %842 = vmatpush2.msra.mxu0 0.0
        %843 = vmatprep.subr.mxu0 0.0
        %844 = vmatpush2.msra.mxu0 0.0
        %845 = vmatprep.subr.mxu0 0.0
        %846 = vmatpush2.msra.mxu0 0.0
        %847 = vmatprep.subr.mxu0 0.0
        %848 = vmatpush2.msra.mxu0 0.0
        %849 = vmatprep.mubr.f32.mxu0 0.0
        %850 = vmatmul.mubr.f32.gmra.mxu0 %v774
        %v851 = vpop.f32.mrf.mxu0
        %v852 = vadd.f32 %v756, %v851
        %v853 = vpop.f32.mrf.mxu0
        %v854 = vadd.f32 %v756, %v853
        %855 = vmatprep.mubr.f32.mxu0 0.0
        %856 = vmatmul.mubr.f32.gmra.mxu0 %v777
        %v857 = vpop.f32.mrf.mxu0
        %v858 = vadd.f32 %v761, %v857
        %v859 = vpop.f32.mrf.mxu0
        %v860 = vadd.f32 %v761, %v859
        %861 = vmatprep.mubr.f32.mxu0 0.0
        %862 = vmatmul.mubr.f32.gmra.mxu0 %v780
        %v863 = vpop.f32.mrf.mxu0
        %v864 = vadd.f32 %v766, %v863
        %v865 = vpop.f32.mrf.mxu0
        %v866 = vadd.f32 %v766, %v865
        %867 = vmatprep.mubr.f32.mxu0 0.0
        %868 = vmatmul.mubr.f32.gmra.mxu0 %v783
        %v869 = vpop.f32.mrf.mxu0
        %v870 = vadd.f32 %v771, %v869
        %v871 = vpop.f32.mrf.mxu0
        %v872 = vadd.f32 %v771, %v871
        %873 = vdwg.mxu0
        %v874 = vmul.f32 %v864, 1.442695
        %v875 = vpow.pop %v874
        %v876 = vmul.f32 %v866, 1.442695
        %v877 = vpow.pop %v876
        %v878 = vmul.f32 %v870, 1.442695
        %v879 = vpow.pop %v878
        %v880 = vmul.f32 %v872, 1.442695
        %v881 = vpow.pop %v880
        %v882 = vld [vmem:[%s444] sm:$0xff]
        %v883 = vld [vmem:[%s444 + $0x8] sm:$0xff]
        %v884 = vld [vmem:[%s444 + $0x10] sm:$0xff]
        %v885 = vld [vmem:[%s444 + $0x18] sm:$0xff]
        %v886 = vmul.f32 %v875, %v882
        %v887 = vmul.f32 %v877, %v883
        %v888 = vmul.f32 %v879, %v884
        %v889 = vmul.f32 %v881, %v885
        %v890 = vadd.f32 %v852, %v886
        %v891 = vadd.f32 %v854, %v887
        %v892 = vadd.f32 %v858, %v888
        %v893 = vadd.f32 %v860, %v889
        %894 = vst [vmem:[%s426] sm:$0xff] %v890
        %895 = vst [vmem:[%s426 + $0x8] sm:$0xff] %v891
        %896 = vst [vmem:[%s426 + $0x10] sm:$0xff] %v892
        %897 = vst [vmem:[%s426 + $0x18] sm:$0xff] %v893
        %v898 = vmul.f32 %v875, %v875
        %v899 = vmul.f32 %v877, %v877
        %v900 = vmul.f32 %v879, %v879
        %v901 = vmul.f32 %v881, %v881
        %v902 = vmul.f32 %v852, %v852
        %v903 = vmul.f32 %v854, %v854
        %v904 = vmul.f32 %v858, %v858
        %v905 = vmul.f32 %v860, %v860
        %v906 = vadd.f32 %v898, %v902
        %v907 = vadd.f32 %v899, %v903
        %v908 = vadd.f32 %v900, %v904
        %v909 = vadd.f32 %v901, %v905
        %v910 = vsub.f32 %v906, %v864
        %v911 = vsub.f32 %v907, %v866
        %v912 = vsub.f32 %v908, %v870
        %v913 = vsub.f32 %v909, %v872
        %v914 = vsub.f32 %v910, 0.5
        %v915 = vsub.f32 %v911, 0.5
        %v916 = vsub.f32 %v912, 0.5
        %v917 = vsub.f32 %v913, 0.5
        %v918 = vadd.f32 %v914, %v915
        %919 = vadd.xlane.f32.xlu0 %v918
        %v920 = vpop.xlane.xlu0 %919
        %v921 = vadd.f32 %v916, %v917
        %922 = vadd.xlane.f32.xlu0 %v921
        %v923 = vpop.xlane.xlu0 %922
        %v924 = vadd.f32 %v920, %v923
        %v925 = vrot.slane %v924, 4
        %v926 = vadd.f32 %v924, %v925
        %v927 = vrot.slane %v926, 2
        %v928 = vadd.f32 %v926, %v927
        %v929 = vrot.slane %v928, 1
        %v930 = vadd.f32 %v928, %v929
        %vm931 = vcmask 0
        %932 = vst.msk [vmem:[%s452] sm:$0x1] %vm931, %v930
        %s933 = sand.u32 %s232, 1
        %s934 = scalar_lea.sflag [#allocation4], %s933
        %s935 = sand.u32 %s232, 1
        %s936 = smul.addr %s935, 32
        %s937 = scalar_lea.vmem [#allocation8], %s936
        %p938 = scmp.lt.s32.totalorder %s32, 1
        %s939 = scalar_select %p938, %s32, 1
        %p940 = scmp.lt.s32.totalorder %s33, 0
        %s941 = scalar_select %p940, %s33, 0
        %s942 = sadd.s32 %s941, %s939
        %s943 = scalar_lea.vmem %s9, %s942
        // Predicated region
        $region65: #{tpu_custom_call.1} parent=51 // pred_check
          %p944 = pneg %p242
        $region66: #{tpu_custom_call.1} parent=51 // pred_check_branch
          %946 = sbr.rel (%p944) target = $region68
        $region67: #{tpu_custom_call.1} parent=51 // pred_region
          %s947 = smul.u32 2, %s33
          %s949 = ssub.s32 512, 512
          %950 = vsyncadd %s934, %s949
          %s951 = smul.addr %s32, 4
          %s952 = sadd.s32 %s947, %s951
          %s953 = smul.addr %s952, 128
          %s954 = scalar_lea.hbm %s8, %s953
          %s955 = sshll.u32 %s937, 4
          %s956 = int_to_ptr.vmem [resolvable:$true] %s955
          %961 = dma.vmem_to_hbm [thread:$0]  %s956, 512, %s954, %s934, 256, 256, 16
        $region68: #{tpu_custom_call.1} parent=51 // pred_fallthru
          _
        // Predicated region
        $region69: #{tpu_custom_call.1} parent=51 // pred_check
          %p962 = pneg %p270
        $region70: #{tpu_custom_call.1} parent=51 // pred_check_branch
          %964 = sbr.rel (%p962) target = $region72
        $region71: #{tpu_custom_call.1} parent=51 // pred_region
          _
        $region72: #{tpu_custom_call.1} parent=51 // pred_fallthru
          _
      $region52: #{tpu_custom_call.1} parent=5 // pred_fallthru
        _
      %p965 = scmp.le.s32.totalorder 2, %s23
      // Predicated region
      $region73: #{tpu_custom_call.1} parent=5 // pred_check
        %p966 = pneg %p965
      $region74: #{tpu_custom_call.1} parent=5 // pred_check_branch
        %968 = sbr.rel (%p966) target = $region76
      $region75: #{tpu_custom_call.1} parent=5 // pred_region
        %s969 = ssub.s32 %s23, 2
        // Predicated region
        $region77: #{tpu_custom_call.1} parent=75 // pred_check
          %p970 = pneg %p248
        $region78: #{tpu_custom_call.1} parent=75 // pred_check_branch
          %972 = sbr.rel (%p970) target = $region80
        $region79: #{tpu_custom_call.1} parent=75 // pred_region
          %s973 = sand.u32 %s233, 1
          %s974 = scalar_lea.sflag [#allocation4], %s973
          %s975 = sand.u32 %s233, 1
          %s976 = smul.addr %s975, 32
          %s977 = scalar_lea.vmem [#allocation8], %s976
          %978 = dma.done %s974, 512
        $region80: #{tpu_custom_call.1} parent=75 // pred_fallthru
          _
        // Predicated region
        $region81: #{tpu_custom_call.1} parent=75 // pred_check
          %p979 = pneg %p276
        $region82: #{tpu_custom_call.1} parent=75 // pred_check_branch
          %981 = sbr.rel (%p979) target = $region84
        $region83: #{tpu_custom_call.1} parent=75 // pred_region
          %p982 = scmp.lt.s32.totalorder %s34, 1
          %s983 = scalar_select %p982, %s34, 1
          %p984 = scmp.lt.s32.totalorder %s35, 0
          %s985 = scalar_select %p984, %s35, 0
          %s986 = sadd.s32 %s985, %s983
          %s987 = scalar_lea.vmem %s9, %s986
        $region84: #{tpu_custom_call.1} parent=75 // pred_fallthru
          _
      $region76: #{tpu_custom_call.1} parent=5 // pred_fallthru
        _
    $region6: #{tpu_custom_call.1} parent=1 // loop_footer
      %s27 = sadd.s32 1, %s23
    $region7: #{tpu_custom_call.1} parent=1 // loop_footer_branch
      %22 = sbr.rel target = $region3
    $region8: #{tpu_custom_call.1} parent=1 // loop_exit
      _
    %988 = vsyncpa [#allocation3], 1
    %s989 = scalar_lea.sflag [#allocation3], 1
    %990 = vsyncpa %s989, 1
    %991 = vsyncpa [#allocation6], 1
    %992 = vsyncpa [#allocation4], 1
    %s993 = scalar_lea.sflag [#allocation4], 1
    %994 = vsyncpa %s993, 1

</llo_original>
